<compile_context>
chip_gen: v5e
topology: v5e:2x2
jax: 0.10.0
libtpu: 0.0.40
codegen_flags: <defaults>
</compile_context>

<pallas_src>
import math

import jax
import jax.numpy as jnp
from jax.experimental import pallas as pl
from jax.experimental.pallas import tpu as pltpu

# ---------------- scaled-down ViT config (mirrors vit_base_patch16_224 structure) ----
PATCH = 16              # patch_embed kernel/stride (same as vit_base_patch16_224)
IMG = 32                # small image -> 2x2 = 4 patches
CHANS = 3
DIM = 32                # embed dim (768 in the real model)
DEPTH = 2               # transformer blocks (12 in the real model)
HEADS = 4
HEAD_DIM = DIM // HEADS
MLP = 4 * DIM           # mlp_ratio = 4
CLASSES = 16            # replaced head: nn.Linear(in_features, num_classes)
EPS = 1e-6              # timm ViT LayerNorm eps
SCALE = HEAD_DIM ** -0.5
INV_SQRT2 = 1.0 / math.sqrt(2.0)

N_PATCH = (IMG // PATCH) ** 2          # 4
SEQ = N_PATCH + 1                      # 5  (cls token + patches)
PDIM = CHANS * PATCH * PATCH           # 768 (flattened patch)


# ---------------------------------- in-kernel helpers --------------------------------
def _ln(x, g, b):
    """LayerNorm matching torch.nn.LayerNorm (biased variance, eps inside rsqrt)."""
    mu = jnp.mean(x, axis=-1, keepdims=True)
    xc = x - mu
    var = jnp.mean(xc * xc, axis=-1, keepdims=True)
    return xc * jax.lax.rsqrt(var + EPS) * g + b


def _gelu(x):
    """Exact (erf-based) GELU, matching torch.nn.GELU() default."""
    return 0.5 * x * (1.0 + jax.lax.erf(x * INV_SQRT2))


# ---------------------------------- the fused ViT kernel ------------------------------
def _vit_kernel(
    p_ref, pw_ref, pb_ref, cls_ref, pos_ref,               # patch embed / tokens
    ln1_g, ln1_b, qkv_w, qkv_b, proj_w, proj_b,            # attention sub-block (stacked over DEPTH)
    ln2_g, ln2_b, fc1_w, fc1_b, fc2_w, fc2_b,              # MLP sub-block (stacked over DEPTH)
    nrm_g, nrm_b, head_w, head_b,                          # final norm + head
    o_ref,                                                 # logits [1, 1, CLASSES]
):
    # ---- patch embed (Conv2d == matmul on flattened patches) + cls + pos -----------
    # Runs exactly once per image now (only K=768 matmul in the kernel).
    xe = (jnp.dot(p_ref[0], pw_ref[...], preferred_element_type=jnp.float32)
          + pb_ref[...] + pos_ref[1:SEQ, :])               # [N_PATCH, DIM]
    cls_row = cls_ref[...] + pos_ref[0:1, :]               # [1, DIM]
    x = jnp.concatenate([cls_row, xe], axis=0)             # [SEQ, DIM], value-resident

    # ---- DEPTH transformer blocks, statically unrolled ------------------------------
    for d in range(DEPTH):
        # attention sub-block: x = x + proj(attn(ln1(x)))
        h = _ln(x, ln1_g[d], ln1_b[d])
        qkv = (jnp.dot(h, qkv_w[d], preferred_element_type=jnp.float32)
               + qkv_b[d])                                 # [SEQ, 3*DIM], kept as value
        q_all = qkv[:, 0:DIM] * SCALE
        k_all = qkv[:, DIM:2 * DIM]
        v_all = qkv[:, 2 * DIM:3 * DIM]

        heads_out = []
        for hh in range(HEADS):                            # unrolled over heads
            c = hh * HEAD_DIM
            q = q_all[:, c:c + HEAD_DIM]                   # [SEQ, Dh]
            k = k_all[:, c:c + HEAD_DIM]
            v = v_all[:, c:c + HEAD_DIM]
            # q @ k^T without materializing a transpose (contract last dims).
            s = jax.lax.dot_general(q, k, (((1,), (1,)), ((), ())),
                                    preferred_element_type=jnp.float32)   # [SEQ, SEQ]
            s = s - jnp.max(s, axis=-1, keepdims=True)
            p = jnp.exp(s)
            p = p / jnp.sum(p, axis=-1, keepdims=True)     # exact softmax divide
            heads_out.append(jnp.dot(p, v, preferred_element_type=jnp.float32))
        o_heads = jnp.concatenate(heads_out, axis=-1)      # [SEQ, DIM]
        x = (x + jnp.dot(o_heads, proj_w[d], preferred_element_type=jnp.float32)
             + proj_b[d])

        # MLP sub-block: x = x + fc2(gelu(fc1(ln2(x))))
        h = _ln(x, ln2_g[d], ln2_b[d])
        h = _gelu(jnp.dot(h, fc1_w[d], preferred_element_type=jnp.float32) + fc1_b[d])
        x = x + jnp.dot(h, fc2_w[d], preferred_element_type=jnp.float32) + fc2_b[d]

    # ---- final norm + cls pooling + new classification head (once per image) -------
    cn = _ln(x[0:1, :], nrm_g[...], nrm_b[...])            # LN of the cls token only
    logits = (jnp.dot(cn, head_w[...], preferred_element_type=jnp.float32)
              + head_b[...])                               # [1, CLASSES]
    o_ref[0] = logits


# ---------------------------------- parameters ----------------------------------------
def init_params(key):
    keys = jax.random.split(key, 8)

    def nrm(k, shape, std=0.02):
        return (std * jax.random.normal(k, shape)).astype(jnp.float32)

    return {
        "patch_w": nrm(keys[0], (PDIM, DIM)),
        "patch_b": jnp.zeros((1, DIM), jnp.float32),
        "cls": nrm(keys[1], (1, DIM)),
        "pos": nrm(keys[2], (SEQ, DIM)),
        "norm_g": jnp.ones((1, DIM), jnp.float32),
        "norm_b": jnp.zeros((1, DIM), jnp.float32),
        "head_w": nrm(keys[3], (DIM, CLASSES)),
        "head_b": jnp.zeros((1, CLASSES), jnp.float32),
        # per-block parameters stacked over DEPTH so one pallas_call handles all blocks
        "blocks": {
            "ln1_g": jnp.ones((DEPTH, 1, DIM), jnp.float32),
            "ln1_b": jnp.zeros((DEPTH, 1, DIM), jnp.float32),
            "qkv_w": nrm(keys[4], (DEPTH, DIM, 3 * DIM)),
            "qkv_b": jnp.zeros((DEPTH, 1, 3 * DIM), jnp.float32),
            "proj_w": nrm(keys[5], (DEPTH, DIM, DIM)),
            "proj_b": jnp.zeros((DEPTH, 1, DIM), jnp.float32),
            "ln2_g": jnp.ones((DEPTH, 1, DIM), jnp.float32),
            "ln2_b": jnp.zeros((DEPTH, 1, DIM), jnp.float32),
            "fc1_w": nrm(keys[6], (DEPTH, DIM, MLP)),
            "fc1_b": jnp.zeros((DEPTH, 1, MLP), jnp.float32),
            "fc2_w": nrm(keys[7], (DEPTH, MLP, DIM)),
            "fc2_b": jnp.zeros((DEPTH, 1, DIM), jnp.float32),
        },
    }


# ---------------------------------- forward pass --------------------------------------
def vit_forward(x, params):
    # x: NCHW float32, [B, C, H, W]  (PyTorch conv layout)
    B, C, H, W = x.shape
    gh, gw = H // PATCH, W // PATCH
    n = gh * gw
    assert C == CHANS and n == N_PATCH

    # patchify (pure data layout, done in plain JAX): NCHW -> [B, N, C*P*P]
    p = x.reshape(B, C, gh, PATCH, gw, PATCH)
    p = p.transpose(0, 2, 4, 1, 3, 5).reshape(B, N_PATCH, PDIM)

    blk = params["blocks"]

    def full_spec(shape):
        nd = len(shape)
        return pl.BlockSpec(shape, lambda b: (0,) * nd)   # whole array, constant block

    in_specs = [
        pl.BlockSpec((1, N_PATCH, PDIM), lambda b: (b, 0, 0)),      # patches (per image)
        full_spec((PDIM, DIM)),                                     # patch_w
        full_spec((1, DIM)),                                        # patch_b
        full_spec((1, DIM)),                                        # cls
        full_spec((SEQ, DIM)),                                      # pos
        full_spec((DEPTH, 1, DIM)), full_spec((DEPTH, 1, DIM)),     # ln1_g, ln1_b
        full_spec((DEPTH, DIM, 3 * DIM)), full_spec((DEPTH, 1, 3 * DIM)),  # qkv_w, qkv_b
        full_spec((DEPTH, DIM, DIM)), full_spec((DEPTH, 1, DIM)),   # proj_w, proj_b
        full_spec((DEPTH, 1, DIM)), full_spec((DEPTH, 1, DIM)),     # ln2_g, ln2_b
        full_spec((DEPTH, DIM, MLP)), full_spec((DEPTH, 1, MLP)),   # fc1_w, fc1_b
        full_spec((DEPTH, MLP, DIM)), full_spec((DEPTH, 1, DIM)),   # fc2_w, fc2_b
        full_spec((1, DIM)), full_spec((1, DIM)),                   # norm_g, norm_b
        full_spec((DIM, CLASSES)), full_spec((1, CLASSES)),         # head_w, head_b
    ]

    logits = pl.pallas_call(
        _vit_kernel,
        out_shape=jax.ShapeDtypeStruct((B, 1, CLASSES), jnp.float32),
        grid=(B,),
        in_specs=in_specs,
        out_specs=pl.BlockSpec((1, 1, CLASSES), lambda b: (b, 0, 0)),
        compiler_params=pltpu.CompilerParams(
            dimension_semantics=("parallel",)),
    )(
        p, params["patch_w"], params["patch_b"], params["cls"], params["pos"],
        blk["ln1_g"], blk["ln1_b"], blk["qkv_w"], blk["qkv_b"],
        blk["proj_w"], blk["proj_b"], blk["ln2_g"], blk["ln2_b"],
        blk["fc1_w"], blk["fc1_b"], blk["fc2_w"], blk["fc2_b"],
        params["norm_g"], params["norm_b"], params["head_w"], params["head_b"],
    )
    return logits.reshape(B, CLASSES)


# ---------------------------------- main ----------------------------------------------
if __name__ == "__main__":
    key = jax.random.PRNGKey(0)
    kp, kx = jax.random.split(key)
    params = init_params(kp)
    x = jax.random.normal(kx, (2, CHANS, IMG, IMG), dtype=jnp.float32)

    logits = jax.jit(vit_forward)(x, params)
    logits = jax.block_until_ready(logits)

    assert logits.shape == (2, CLASSES)
    assert jnp.all(jnp.isfinite(logits))
    print("KERNEL_OK")
</pallas_src>

<mosaic_0001>
module attributes {stable_mosaic.version = 11 : i64} {
  func.func @_vit_kernel(%arg0: i32, %arg1: memref<1x4x768xf32, #tpu.memory_space<vmem>>, %arg2: memref<768x32xf32, #tpu.memory_space<vmem>>, %arg3: memref<1x32xf32, #tpu.memory_space<vmem>>, %arg4: memref<1x32xf32, #tpu.memory_space<vmem>>, %arg5: memref<5x32xf32, #tpu.memory_space<vmem>>, %arg6: memref<2x1x32xf32, #tpu.memory_space<vmem>>, %arg7: memref<2x1x32xf32, #tpu.memory_space<vmem>>, %arg8: memref<2x32x96xf32, #tpu.memory_space<vmem>>, %arg9: memref<2x1x96xf32, #tpu.memory_space<vmem>>, %arg10: memref<2x32x32xf32, #tpu.memory_space<vmem>>, %arg11: memref<2x1x32xf32, #tpu.memory_space<vmem>>, %arg12: memref<2x1x32xf32, #tpu.memory_space<vmem>>, %arg13: memref<2x1x32xf32, #tpu.memory_space<vmem>>, %arg14: memref<2x32x128xf32, #tpu.memory_space<vmem>>, %arg15: memref<2x1x128xf32, #tpu.memory_space<vmem>>, %arg16: memref<2x128x32xf32, #tpu.memory_space<vmem>>, %arg17: memref<2x1x32xf32, #tpu.memory_space<vmem>>, %arg18: memref<1x32xf32, #tpu.memory_space<vmem>>, %arg19: memref<1x32xf32, #tpu.memory_space<vmem>>, %arg20: memref<32x16xf32, #tpu.memory_space<vmem>>, %arg21: memref<1x16xf32, #tpu.memory_space<vmem>>, %arg22: memref<1x1x16xf32, #tpu.memory_space<vmem>>) attributes {dimension_semantics = [#tpu.dimension_semantics<parallel>], iteration_bounds = array<i64: 2>, scalar_prefetch = 0 : i64, scratch_operands = 0 : i64, tpu.core_type = #tpu.core_type<tc>, window_params = [{transform_indices = @transform_0, window_bounds = array<i64: 1, 4, 768>}, {pipeline_mode = #tpu.pipeline_mode<synchronous>, transform_indices = @transform_1, window_bounds = array<i64: 768, 32>}, {pipeline_mode = #tpu.pipeline_mode<synchronous>, transform_indices = @transform_2, window_bounds = array<i64: 1, 32>}, {pipeline_mode = #tpu.pipeline_mode<synchronous>, transform_indices = @transform_3, window_bounds = array<i64: 1, 32>}, {pipeline_mode = #tpu.pipeline_mode<synchronous>, transform_indices = @transform_4, window_bounds = array<i64: 5, 32>}, {pipeline_mode = #tpu.pipeline_mode<synchronous>, transform_indices = @transform_5, window_bounds = array<i64: 2, 1, 32>}, {pipeline_mode = #tpu.pipeline_mode<synchronous>, transform_indices = @transform_6, window_bounds = array<i64: 2, 1, 32>}, {pipeline_mode = #tpu.pipeline_mode<synchronous>, transform_indices = @transform_7, window_bounds = array<i64: 2, 32, 96>}, {pipeline_mode = #tpu.pipeline_mode<synchronous>, transform_indices = @transform_8, window_bounds = array<i64: 2, 1, 96>}, {pipeline_mode = #tpu.pipeline_mode<synchronous>, transform_indices = @transform_9, window_bounds = array<i64: 2, 32, 32>}, {pipeline_mode = #tpu.pipeline_mode<synchronous>, transform_indices = @transform_10, window_bounds = array<i64: 2, 1, 32>}, {pipeline_mode = #tpu.pipeline_mode<synchronous>, transform_indices = @transform_11, window_bounds = array<i64: 2, 1, 32>}, {pipeline_mode = #tpu.pipeline_mode<synchronous>, transform_indices = @transform_12, window_bounds = array<i64: 2, 1, 32>}, {pipeline_mode = #tpu.pipeline_mode<synchronous>, transform_indices = @transform_13, window_bounds = array<i64: 2, 32, 128>}, {pipeline_mode = #tpu.pipeline_mode<synchronous>, transform_indices = @transform_14, window_bounds = array<i64: 2, 1, 128>}, {pipeline_mode = #tpu.pipeline_mode<synchronous>, transform_indices = @transform_15, window_bounds = array<i64: 2, 128, 32>}, {pipeline_mode = #tpu.pipeline_mode<synchronous>, transform_indices = @transform_16, window_bounds = array<i64: 2, 1, 32>}, {pipeline_mode = #tpu.pipeline_mode<synchronous>, transform_indices = @transform_17, window_bounds = array<i64: 1, 32>}, {pipeline_mode = #tpu.pipeline_mode<synchronous>, transform_indices = @transform_18, window_bounds = array<i64: 1, 32>}, {pipeline_mode = #tpu.pipeline_mode<synchronous>, transform_indices = @transform_19, window_bounds = array<i64: 32, 16>}, {pipeline_mode = #tpu.pipeline_mode<synchronous>, transform_indices = @transform_20, window_bounds = array<i64: 1, 16>}, {transform_indices = @transform_21, window_bounds = array<i64: 1, 1, 16>}]} {
    %c0 = arith.constant 0 : index
    %c0_0 = arith.constant 0 : index
    %c0_1 = arith.constant 0 : index
    %0 = vector.load %arg1[%c0, %c0_0, %c0_1] : memref<1x4x768xf32, #tpu.memory_space<vmem>>, vector<1x4x768xf32>
    %1 = vector.shape_cast %0 : vector<1x4x768xf32> to vector<4x768xf32>
    %c0_2 = arith.constant 0 : index
    %c0_3 = arith.constant 0 : index
    %2 = vector.load %arg2[%c0_2, %c0_3] : memref<768x32xf32, #tpu.memory_space<vmem>>, vector<768x32xf32>
    %cst = arith.constant dense<0.000000e+00> : vector<4x32xf32>
    %3 = tpu.matmul %1, %2, %cst {dimension_numbers = #tpu.dot_dimension_numbers<[1], [0], [0], [1], [0, 0, 1, 1], [], []>} : vector<4x768xf32>, vector<768x32xf32>, vector<4x32xf32> -> vector<4x32xf32>
    %c0_4 = arith.constant 0 : index
    %c0_5 = arith.constant 0 : index
    %4 = vector.load %arg3[%c0_4, %c0_5] : memref<1x32xf32, #tpu.memory_space<vmem>>, vector<1x32xf32>
    %5 = vector.broadcast %4 : vector<1x32xf32> to vector<4x32xf32>
    %6 = arith.addf %3, %5 : vector<4x32xf32>
    %c1 = arith.constant 1 : index
    %c0_6 = arith.constant 0 : index
    %7 = vector.load %arg5[%c1, %c0_6] : memref<5x32xf32, #tpu.memory_space<vmem>>, vector<4x32xf32>
    %8 = arith.addf %6, %7 : vector<4x32xf32>
    %c0_7 = arith.constant 0 : index
    %c0_8 = arith.constant 0 : index
    %9 = vector.load %arg4[%c0_7, %c0_8] : memref<1x32xf32, #tpu.memory_space<vmem>>, vector<1x32xf32>
    %c0_9 = arith.constant 0 : index
    %c0_10 = arith.constant 0 : index
    %10 = vector.load %arg5[%c0_9, %c0_10] : memref<5x32xf32, #tpu.memory_space<vmem>>, vector<1x32xf32>
    %11 = arith.addf %9, %10 : vector<1x32xf32>
    %12 = tpu.concatenate %11, %8 in 0 : vector<1x32xf32>, vector<4x32xf32> -> vector<5x32xf32>
    %c0_11 = arith.constant 0 : index
    %c0_12 = arith.constant 0 : index
    %c0_13 = arith.constant 0 : index
    %13 = vector.load %arg6[%c0_11, %c0_12, %c0_13] : memref<2x1x32xf32, #tpu.memory_space<vmem>>, vector<1x1x32xf32>
    %14 = vector.shape_cast %13 : vector<1x1x32xf32> to vector<1x32xf32>
    %c0_14 = arith.constant 0 : index
    %c0_15 = arith.constant 0 : index
    %c0_16 = arith.constant 0 : index
    %15 = vector.load %arg7[%c0_14, %c0_15, %c0_16] : memref<2x1x32xf32, #tpu.memory_space<vmem>>, vector<1x1x32xf32>
    %16 = vector.shape_cast %15 : vector<1x1x32xf32> to vector<1x32xf32>
    %cst_17 = arith.constant dense<0.000000e+00> : vector<5xf32>
    %17 = vector.multi_reduction <add>, %12, %cst_17 [1] : vector<5x32xf32> to vector<5xf32>
    %18 = vector.shape_cast %17 : vector<5xf32> to vector<5x1xf32>
    %cst_18 = arith.constant 3.200000e+01 : f32
    %19 = vector.broadcast %cst_18 : f32 to vector<5x1xf32>
    %20 = arith.divf %18, %19 : vector<5x1xf32>
    %21 = vector.broadcast %20 : vector<5x1xf32> to vector<5x32xf32>
    %22 = arith.subf %12, %21 : vector<5x32xf32>
    %23 = arith.mulf %22, %22 : vector<5x32xf32>
    %cst_19 = arith.constant dense<0.000000e+00> : vector<5xf32>
    %24 = vector.multi_reduction <add>, %23, %cst_19 [1] : vector<5x32xf32> to vector<5xf32>
    %25 = vector.shape_cast %24 : vector<5xf32> to vector<5x1xf32>
    %cst_20 = arith.constant 3.200000e+01 : f32
    %26 = vector.broadcast %cst_20 : f32 to vector<5x1xf32>
    %27 = arith.divf %25, %26 : vector<5x1xf32>
    %cst_21 = arith.constant 9.99999997E-7 : f32
    %28 = vector.broadcast %cst_21 : f32 to vector<5x1xf32>
    %29 = arith.addf %27, %28 : vector<5x1xf32>
    %30 = math.rsqrt %29 : vector<5x1xf32>
    %31 = vector.broadcast %30 : vector<5x1xf32> to vector<5x32xf32>
    %32 = arith.mulf %22, %31 : vector<5x32xf32>
    %33 = vector.broadcast %14 : vector<1x32xf32> to vector<5x32xf32>
    %34 = arith.mulf %32, %33 : vector<5x32xf32>
    %35 = vector.broadcast %16 : vector<1x32xf32> to vector<5x32xf32>
    %36 = arith.addf %34, %35 : vector<5x32xf32>
    %c0_22 = arith.constant 0 : index
    %c0_23 = arith.constant 0 : index
    %c0_24 = arith.constant 0 : index
    %37 = vector.load %arg8[%c0_22, %c0_23, %c0_24] : memref<2x32x96xf32, #tpu.memory_space<vmem>>, vector<1x32x96xf32>
    %38 = vector.shape_cast %37 : vector<1x32x96xf32> to vector<32x96xf32>
    %cst_25 = arith.constant dense<0.000000e+00> : vector<5x96xf32>
    %39 = tpu.matmul %36, %38, %cst_25 {dimension_numbers = #tpu.dot_dimension_numbers<[1], [0], [0], [1], [0, 0, 1, 1], [], []>} : vector<5x32xf32>, vector<32x96xf32>, vector<5x96xf32> -> vector<5x96xf32>
    %c0_26 = arith.constant 0 : index
    %c0_27 = arith.constant 0 : index
    %c0_28 = arith.constant 0 : index
    %40 = vector.load %arg9[%c0_26, %c0_27, %c0_28] : memref<2x1x96xf32, #tpu.memory_space<vmem>>, vector<1x1x96xf32>
    %41 = vector.shape_cast %40 : vector<1x1x96xf32> to vector<1x96xf32>
    %42 = vector.broadcast %41 : vector<1x96xf32> to vector<5x96xf32>
    %43 = arith.addf %39, %42 : vector<5x96xf32>
    %44 = vector.extract_strided_slice %43 {offsets = [0, 0], sizes = [5, 32], strides = [1, 1]} : vector<5x96xf32> to vector<5x32xf32>
    %cst_29 = arith.constant 0.353553385 : f32
    %45 = vector.broadcast %cst_29 : f32 to vector<5x32xf32>
    %46 = arith.mulf %44, %45 : vector<5x32xf32>
    %47 = vector.extract_strided_slice %43 {offsets = [0, 32], sizes = [5, 32], strides = [1, 1]} : vector<5x96xf32> to vector<5x32xf32>
    %48 = vector.extract_strided_slice %43 {offsets = [0, 64], sizes = [5, 32], strides = [1, 1]} : vector<5x96xf32> to vector<5x32xf32>
    %49 = vector.extract_strided_slice %46 {offsets = [0, 0], sizes = [5, 8], strides = [1, 1]} : vector<5x32xf32> to vector<5x8xf32>
    %50 = vector.extract_strided_slice %47 {offsets = [0, 0], sizes = [5, 8], strides = [1, 1]} : vector<5x32xf32> to vector<5x8xf32>
    %51 = vector.extract_strided_slice %48 {offsets = [0, 0], sizes = [5, 8], strides = [1, 1]} : vector<5x32xf32> to vector<5x8xf32>
    %cst_30 = arith.constant dense<0.000000e+00> : vector<5x5xf32>
    %52 = tpu.matmul %49, %50, %cst_30 {dimension_numbers = #tpu.dot_dimension_numbers<[1], [1], [0], [0], [0, 0, 1, 0], [], []>} : vector<5x8xf32>, vector<5x8xf32>, vector<5x5xf32> -> vector<5x5xf32>
    %cst_31 = arith.constant dense<0xFF800000> : vector<5xf32>
    %53 = vector.multi_reduction <maximumf>, %52, %cst_31 [1] : vector<5x5xf32> to vector<5xf32>
    %54 = vector.shape_cast %53 : vector<5xf32> to vector<5x1xf32>
    %55 = vector.broadcast %54 : vector<5x1xf32> to vector<5x5xf32>
    %56 = arith.subf %52, %55 : vector<5x5xf32>
    %57 = math.exp %56 : vector<5x5xf32>
    %cst_32 = arith.constant dense<0.000000e+00> : vector<5xf32>
    %58 = vector.multi_reduction <add>, %57, %cst_32 [1] : vector<5x5xf32> to vector<5xf32>
    %59 = vector.shape_cast %58 : vector<5xf32> to vector<5x1xf32>
    %60 = vector.broadcast %59 : vector<5x1xf32> to vector<5x5xf32>
    %61 = arith.divf %57, %60 : vector<5x5xf32>
    %cst_33 = arith.constant dense<0.000000e+00> : vector<5x8xf32>
    %62 = tpu.matmul %61, %51, %cst_33 {dimension_numbers = #tpu.dot_dimension_numbers<[1], [0], [0], [1], [0, 0, 1, 1], [], []>} : vector<5x5xf32>, vector<5x8xf32>, vector<5x8xf32> -> vector<5x8xf32>
    %63 = vector.extract_strided_slice %46 {offsets = [0, 8], sizes = [5, 8], strides = [1, 1]} : vector<5x32xf32> to vector<5x8xf32>
    %64 = vector.extract_strided_slice %47 {offsets = [0, 8], sizes = [5, 8], strides = [1, 1]} : vector<5x32xf32> to vector<5x8xf32>
    %65 = vector.extract_strided_slice %48 {offsets = [0, 8], sizes = [5, 8], strides = [1, 1]} : vector<5x32xf32> to vector<5x8xf32>
    %cst_34 = arith.constant dense<0.000000e+00> : vector<5x5xf32>
    %66 = tpu.matmul %63, %64, %cst_34 {dimension_numbers = #tpu.dot_dimension_numbers<[1], [1], [0], [0], [0, 0, 1, 0], [], []>} : vector<5x8xf32>, vector<5x8xf32>, vector<5x5xf32> -> vector<5x5xf32>
    %cst_35 = arith.constant dense<0xFF800000> : vector<5xf32>
    %67 = vector.multi_reduction <maximumf>, %66, %cst_35 [1] : vector<5x5xf32> to vector<5xf32>
    %68 = vector.shape_cast %67 : vector<5xf32> to vector<5x1xf32>
    %69 = vector.broadcast %68 : vector<5x1xf32> to vector<5x5xf32>
    %70 = arith.subf %66, %69 : vector<5x5xf32>
    %71 = math.exp %70 : vector<5x5xf32>
    %cst_36 = arith.constant dense<0.000000e+00> : vector<5xf32>
    %72 = vector.multi_reduction <add>, %71, %cst_36 [1] : vector<5x5xf32> to vector<5xf32>
    %73 = vector.shape_cast %72 : vector<5xf32> to vector<5x1xf32>
    %74 = vector.broadcast %73 : vector<5x1xf32> to vector<5x5xf32>
    %75 = arith.divf %71, %74 : vector<5x5xf32>
    %cst_37 = arith.constant dense<0.000000e+00> : vector<5x8xf32>
    %76 = tpu.matmul %75, %65, %cst_37 {dimension_numbers = #tpu.dot_dimension_numbers<[1], [0], [0], [1], [0, 0, 1, 1], [], []>} : vector<5x5xf32>, vector<5x8xf32>, vector<5x8xf32> -> vector<5x8xf32>
    %77 = vector.extract_strided_slice %46 {offsets = [0, 16], sizes = [5, 8], strides = [1, 1]} : vector<5x32xf32> to vector<5x8xf32>
    %78 = vector.extract_strided_slice %47 {offsets = [0, 16], sizes = [5, 8], strides = [1, 1]} : vector<5x32xf32> to vector<5x8xf32>
    %79 = vector.extract_strided_slice %48 {offsets = [0, 16], sizes = [5, 8], strides = [1, 1]} : vector<5x32xf32> to vector<5x8xf32>
    %cst_38 = arith.constant dense<0.000000e+00> : vector<5x5xf32>
    %80 = tpu.matmul %77, %78, %cst_38 {dimension_numbers = #tpu.dot_dimension_numbers<[1], [1], [0], [0], [0, 0, 1, 0], [], []>} : vector<5x8xf32>, vector<5x8xf32>, vector<5x5xf32> -> vector<5x5xf32>
    %cst_39 = arith.constant dense<0xFF800000> : vector<5xf32>
    %81 = vector.multi_reduction <maximumf>, %80, %cst_39 [1] : vector<5x5xf32> to vector<5xf32>
    %82 = vector.shape_cast %81 : vector<5xf32> to vector<5x1xf32>
    %83 = vector.broadcast %82 : vector<5x1xf32> to vector<5x5xf32>
    %84 = arith.subf %80, %83 : vector<5x5xf32>
    %85 = math.exp %84 : vector<5x5xf32>
    %cst_40 = arith.constant dense<0.000000e+00> : vector<5xf32>
    %86 = vector.multi_reduction <add>, %85, %cst_40 [1] : vector<5x5xf32> to vector<5xf32>
    %87 = vector.shape_cast %86 : vector<5xf32> to vector<5x1xf32>
    %88 = vector.broadcast %87 : vector<5x1xf32> to vector<5x5xf32>
    %89 = arith.divf %85, %88 : vector<5x5xf32>
    %cst_41 = arith.constant dense<0.000000e+00> : vector<5x8xf32>
    %90 = tpu.matmul %89, %79, %cst_41 {dimension_numbers = #tpu.dot_dimension_numbers<[1], [0], [0], [1], [0, 0, 1, 1], [], []>} : vector<5x5xf32>, vector<5x8xf32>, vector<5x8xf32> -> vector<5x8xf32>
    %91 = vector.extract_strided_slice %46 {offsets = [0, 24], sizes = [5, 8], strides = [1, 1]} : vector<5x32xf32> to vector<5x8xf32>
    %92 = vector.extract_strided_slice %47 {offsets = [0, 24], sizes = [5, 8], strides = [1, 1]} : vector<5x32xf32> to vector<5x8xf32>
    %93 = vector.extract_strided_slice %48 {offsets = [0, 24], sizes = [5, 8], strides = [1, 1]} : vector<5x32xf32> to vector<5x8xf32>
    %cst_42 = arith.constant dense<0.000000e+00> : vector<5x5xf32>
    %94 = tpu.matmul %91, %92, %cst_42 {dimension_numbers = #tpu.dot_dimension_numbers<[1], [1], [0], [0], [0, 0, 1, 0], [], []>} : vector<5x8xf32>, vector<5x8xf32>, vector<5x5xf32> -> vector<5x5xf32>
    %cst_43 = arith.constant dense<0xFF800000> : vector<5xf32>
    %95 = vector.multi_reduction <maximumf>, %94, %cst_43 [1] : vector<5x5xf32> to vector<5xf32>
    %96 = vector.shape_cast %95 : vector<5xf32> to vector<5x1xf32>
    %97 = vector.broadcast %96 : vector<5x1xf32> to vector<5x5xf32>
    %98 = arith.subf %94, %97 : vector<5x5xf32>
    %99 = math.exp %98 : vector<5x5xf32>
    %cst_44 = arith.constant dense<0.000000e+00> : vector<5xf32>
    %100 = vector.multi_reduction <add>, %99, %cst_44 [1] : vector<5x5xf32> to vector<5xf32>
    %101 = vector.shape_cast %100 : vector<5xf32> to vector<5x1xf32>
    %102 = vector.broadcast %101 : vector<5x1xf32> to vector<5x5xf32>
    %103 = arith.divf %99, %102 : vector<5x5xf32>
    %cst_45 = arith.constant dense<0.000000e+00> : vector<5x8xf32>
    %104 = tpu.matmul %103, %93, %cst_45 {dimension_numbers = #tpu.dot_dimension_numbers<[1], [0], [0], [1], [0, 0, 1, 1], [], []>} : vector<5x5xf32>, vector<5x8xf32>, vector<5x8xf32> -> vector<5x8xf32>
    %105 = tpu.concatenate %62, %76, %90, %104 in 1 : vector<5x8xf32>, vector<5x8xf32>, vector<5x8xf32>, vector<5x8xf32> -> vector<5x32xf32>
    %c0_46 = arith.constant 0 : index
    %c0_47 = arith.constant 0 : index
    %c0_48 = arith.constant 0 : index
    %106 = vector.load %arg10[%c0_46, %c0_47, %c0_48] : memref<2x32x32xf32, #tpu.memory_space<vmem>>, vector<1x32x32xf32>
    %107 = vector.shape_cast %106 : vector<1x32x32xf32> to vector<32x32xf32>
    %cst_49 = arith.constant dense<0.000000e+00> : vector<5x32xf32>
    %108 = tpu.matmul %105, %107, %cst_49 {dimension_numbers = #tpu.dot_dimension_numbers<[1], [0], [0], [1], [0, 0, 1, 1], [], []>} : vector<5x32xf32>, vector<32x32xf32>, vector<5x32xf32> -> vector<5x32xf32>
    %109 = arith.addf %12, %108 : vector<5x32xf32>
    %c0_50 = arith.constant 0 : index
    %c0_51 = arith.constant 0 : index
    %c0_52 = arith.constant 0 : index
    %110 = vector.load %arg11[%c0_50, %c0_51, %c0_52] : memref<2x1x32xf32, #tpu.memory_space<vmem>>, vector<1x1x32xf32>
    %111 = vector.shape_cast %110 : vector<1x1x32xf32> to vector<1x32xf32>
    %112 = vector.broadcast %111 : vector<1x32xf32> to vector<5x32xf32>
    %113 = arith.addf %109, %112 : vector<5x32xf32>
    %c0_53 = arith.constant 0 : index
    %c0_54 = arith.constant 0 : index
    %c0_55 = arith.constant 0 : index
    %114 = vector.load %arg12[%c0_53, %c0_54, %c0_55] : memref<2x1x32xf32, #tpu.memory_space<vmem>>, vector<1x1x32xf32>
    %115 = vector.shape_cast %114 : vector<1x1x32xf32> to vector<1x32xf32>
    %c0_56 = arith.constant 0 : index
    %c0_57 = arith.constant 0 : index
    %c0_58 = arith.constant 0 : index
    %116 = vector.load %arg13[%c0_56, %c0_57, %c0_58] : memref<2x1x32xf32, #tpu.memory_space<vmem>>, vector<1x1x32xf32>
    %117 = vector.shape_cast %116 : vector<1x1x32xf32> to vector<1x32xf32>
    %cst_59 = arith.constant dense<0.000000e+00> : vector<5xf32>
    %118 = vector.multi_reduction <add>, %113, %cst_59 [1] : vector<5x32xf32> to vector<5xf32>
    %119 = vector.shape_cast %118 : vector<5xf32> to vector<5x1xf32>
    %cst_60 = arith.constant 3.200000e+01 : f32
    %120 = vector.broadcast %cst_60 : f32 to vector<5x1xf32>
    %121 = arith.divf %119, %120 : vector<5x1xf32>
    %122 = vector.broadcast %121 : vector<5x1xf32> to vector<5x32xf32>
    %123 = arith.subf %113, %122 : vector<5x32xf32>
    %124 = arith.mulf %123, %123 : vector<5x32xf32>
    %cst_61 = arith.constant dense<0.000000e+00> : vector<5xf32>
    %125 = vector.multi_reduction <add>, %124, %cst_61 [1] : vector<5x32xf32> to vector<5xf32>
    %126 = vector.shape_cast %125 : vector<5xf32> to vector<5x1xf32>
    %cst_62 = arith.constant 3.200000e+01 : f32
    %127 = vector.broadcast %cst_62 : f32 to vector<5x1xf32>
    %128 = arith.divf %126, %127 : vector<5x1xf32>
    %cst_63 = arith.constant 9.99999997E-7 : f32
    %129 = vector.broadcast %cst_63 : f32 to vector<5x1xf32>
    %130 = arith.addf %128, %129 : vector<5x1xf32>
    %131 = math.rsqrt %130 : vector<5x1xf32>
    %132 = vector.broadcast %131 : vector<5x1xf32> to vector<5x32xf32>
    %133 = arith.mulf %123, %132 : vector<5x32xf32>
    %134 = vector.broadcast %115 : vector<1x32xf32> to vector<5x32xf32>
    %135 = arith.mulf %133, %134 : vector<5x32xf32>
    %136 = vector.broadcast %117 : vector<1x32xf32> to vector<5x32xf32>
    %137 = arith.addf %135, %136 : vector<5x32xf32>
    %c0_64 = arith.constant 0 : index
    %c0_65 = arith.constant 0 : index
    %c0_66 = arith.constant 0 : index
    %138 = vector.load %arg14[%c0_64, %c0_65, %c0_66] : memref<2x32x128xf32, #tpu.memory_space<vmem>>, vector<1x32x128xf32>
    %139 = vector.shape_cast %138 : vector<1x32x128xf32> to vector<32x128xf32>
    %cst_67 = arith.constant dense<0.000000e+00> : vector<5x128xf32>
    %140 = tpu.matmul %137, %139, %cst_67 {dimension_numbers = #tpu.dot_dimension_numbers<[1], [0], [0], [1], [0, 0, 1, 1], [], []>} : vector<5x32xf32>, vector<32x128xf32>, vector<5x128xf32> -> vector<5x128xf32>
    %c0_68 = arith.constant 0 : index
    %c0_69 = arith.constant 0 : index
    %c0_70 = arith.constant 0 : index
    %141 = vector.load %arg15[%c0_68, %c0_69, %c0_70] : memref<2x1x128xf32, #tpu.memory_space<vmem>>, vector<1x1x128xf32>
    %142 = vector.shape_cast %141 : vector<1x1x128xf32> to vector<1x128xf32>
    %143 = vector.broadcast %142 : vector<1x128xf32> to vector<5x128xf32>
    %144 = arith.addf %140, %143 : vector<5x128xf32>
    %cst_71 = arith.constant 5.000000e-01 : f32
    %145 = vector.broadcast %cst_71 : f32 to vector<5x128xf32>
    %146 = arith.mulf %145, %144 : vector<5x128xf32>
    %cst_72 = arith.constant 0.707106769 : f32
    %147 = vector.broadcast %cst_72 : f32 to vector<5x128xf32>
    %148 = arith.mulf %144, %147 : vector<5x128xf32>
    %149 = math.erf %148 : vector<5x128xf32>
    %cst_73 = arith.constant 1.000000e+00 : f32
    %150 = vector.broadcast %cst_73 : f32 to vector<5x128xf32>
    %151 = arith.addf %150, %149 : vector<5x128xf32>
    %152 = arith.mulf %146, %151 : vector<5x128xf32>
    %c0_74 = arith.constant 0 : index
    %c0_75 = arith.constant 0 : index
    %c0_76 = arith.constant 0 : index
    %153 = vector.load %arg16[%c0_74, %c0_75, %c0_76] : memref<2x128x32xf32, #tpu.memory_space<vmem>>, vector<1x128x32xf32>
    %154 = vector.shape_cast %153 : vector<1x128x32xf32> to vector<128x32xf32>
    %cst_77 = arith.constant dense<0.000000e+00> : vector<5x32xf32>
    %155 = tpu.matmul %152, %154, %cst_77 {dimension_numbers = #tpu.dot_dimension_numbers<[1], [0], [0], [1], [0, 0, 1, 1], [], []>} : vector<5x128xf32>, vector<128x32xf32>, vector<5x32xf32> -> vector<5x32xf32>
    %156 = arith.addf %113, %155 : vector<5x32xf32>
    %c0_78 = arith.constant 0 : index
    %c0_79 = arith.constant 0 : index
    %c0_80 = arith.constant 0 : index
    %157 = vector.load %arg17[%c0_78, %c0_79, %c0_80] : memref<2x1x32xf32, #tpu.memory_space<vmem>>, vector<1x1x32xf32>
    %158 = vector.shape_cast %157 : vector<1x1x32xf32> to vector<1x32xf32>
    %159 = vector.broadcast %158 : vector<1x32xf32> to vector<5x32xf32>
    %160 = arith.addf %156, %159 : vector<5x32xf32>
    %c1_81 = arith.constant 1 : index
    %c0_82 = arith.constant 0 : index
    %c0_83 = arith.constant 0 : index
    %161 = vector.load %arg6[%c1_81, %c0_82, %c0_83] : memref<2x1x32xf32, #tpu.memory_space<vmem>>, vector<1x1x32xf32>
    %162 = vector.shape_cast %161 : vector<1x1x32xf32> to vector<1x32xf32>
    %c1_84 = arith.constant 1 : index
    %c0_85 = arith.constant 0 : index
    %c0_86 = arith.constant 0 : index
    %163 = vector.load %arg7[%c1_84, %c0_85, %c0_86] : memref<2x1x32xf32, #tpu.memory_space<vmem>>, vector<1x1x32xf32>
    %164 = vector.shape_cast %163 : vector<1x1x32xf32> to vector<1x32xf32>
    %cst_87 = arith.constant dense<0.000000e+00> : vector<5xf32>
    %165 = vector.multi_reduction <add>, %160, %cst_87 [1] : vector<5x32xf32> to vector<5xf32>
    %166 = vector.shape_cast %165 : vector<5xf32> to vector<5x1xf32>
    %cst_88 = arith.constant 3.200000e+01 : f32
    %167 = vector.broadcast %cst_88 : f32 to vector<5x1xf32>
    %168 = arith.divf %166, %167 : vector<5x1xf32>
    %169 = vector.broadcast %168 : vector<5x1xf32> to vector<5x32xf32>
    %170 = arith.subf %160, %169 : vector<5x32xf32>
    %171 = arith.mulf %170, %170 : vector<5x32xf32>
    %cst_89 = arith.constant dense<0.000000e+00> : vector<5xf32>
    %172 = vector.multi_reduction <add>, %171, %cst_89 [1] : vector<5x32xf32> to vector<5xf32>
    %173 = vector.shape_cast %172 : vector<5xf32> to vector<5x1xf32>
    %cst_90 = arith.constant 3.200000e+01 : f32
    %174 = vector.broadcast %cst_90 : f32 to vector<5x1xf32>
    %175 = arith.divf %173, %174 : vector<5x1xf32>
    %cst_91 = arith.constant 9.99999997E-7 : f32
    %176 = vector.broadcast %cst_91 : f32 to vector<5x1xf32>
    %177 = arith.addf %175, %176 : vector<5x1xf32>
    %178 = math.rsqrt %177 : vector<5x1xf32>
    %179 = vector.broadcast %178 : vector<5x1xf32> to vector<5x32xf32>
    %180 = arith.mulf %170, %179 : vector<5x32xf32>
    %181 = vector.broadcast %162 : vector<1x32xf32> to vector<5x32xf32>
    %182 = arith.mulf %180, %181 : vector<5x32xf32>
    %183 = vector.broadcast %164 : vector<1x32xf32> to vector<5x32xf32>
    %184 = arith.addf %182, %183 : vector<5x32xf32>
    %c1_92 = arith.constant 1 : index
    %c0_93 = arith.constant 0 : index
    %c0_94 = arith.constant 0 : index
    %185 = vector.load %arg8[%c1_92, %c0_93, %c0_94] : memref<2x32x96xf32, #tpu.memory_space<vmem>>, vector<1x32x96xf32>
    %186 = vector.shape_cast %185 : vector<1x32x96xf32> to vector<32x96xf32>
    %cst_95 = arith.constant dense<0.000000e+00> : vector<5x96xf32>
    %187 = tpu.matmul %184, %186, %cst_95 {dimension_numbers = #tpu.dot_dimension_numbers<[1], [0], [0], [1], [0, 0, 1, 1], [], []>} : vector<5x32xf32>, vector<32x96xf32>, vector<5x96xf32> -> vector<5x96xf32>
    %c1_96 = arith.constant 1 : index
    %c0_97 = arith.constant 0 : index
    %c0_98 = arith.constant 0 : index
    %188 = vector.load %arg9[%c1_96, %c0_97, %c0_98] : memref<2x1x96xf32, #tpu.memory_space<vmem>>, vector<1x1x96xf32>
    %189 = vector.shape_cast %188 : vector<1x1x96xf32> to vector<1x96xf32>
    %190 = vector.broadcast %189 : vector<1x96xf32> to vector<5x96xf32>
    %191 = arith.addf %187, %190 : vector<5x96xf32>
    %192 = vector.extract_strided_slice %191 {offsets = [0, 0], sizes = [5, 32], strides = [1, 1]} : vector<5x96xf32> to vector<5x32xf32>
    %cst_99 = arith.constant 0.353553385 : f32
    %193 = vector.broadcast %cst_99 : f32 to vector<5x32xf32>
    %194 = arith.mulf %192, %193 : vector<5x32xf32>
    %195 = vector.extract_strided_slice %191 {offsets = [0, 32], sizes = [5, 32], strides = [1, 1]} : vector<5x96xf32> to vector<5x32xf32>
    %196 = vector.extract_strided_slice %191 {offsets = [0, 64], sizes = [5, 32], strides = [1, 1]} : vector<5x96xf32> to vector<5x32xf32>
    %197 = vector.extract_strided_slice %194 {offsets = [0, 0], sizes = [5, 8], strides = [1, 1]} : vector<5x32xf32> to vector<5x8xf32>
    %198 = vector.extract_strided_slice %195 {offsets = [0, 0], sizes = [5, 8], strides = [1, 1]} : vector<5x32xf32> to vector<5x8xf32>
    %199 = vector.extract_strided_slice %196 {offsets = [0, 0], sizes = [5, 8], strides = [1, 1]} : vector<5x32xf32> to vector<5x8xf32>
    %cst_100 = arith.constant dense<0.000000e+00> : vector<5x5xf32>
    %200 = tpu.matmul %197, %198, %cst_100 {dimension_numbers = #tpu.dot_dimension_numbers<[1], [1], [0], [0], [0, 0, 1, 0], [], []>} : vector<5x8xf32>, vector<5x8xf32>, vector<5x5xf32> -> vector<5x5xf32>
    %cst_101 = arith.constant dense<0xFF800000> : vector<5xf32>
    %201 = vector.multi_reduction <maximumf>, %200, %cst_101 [1] : vector<5x5xf32> to vector<5xf32>
    %202 = vector.shape_cast %201 : vector<5xf32> to vector<5x1xf32>
    %203 = vector.broadcast %202 : vector<5x1xf32> to vector<5x5xf32>
    %204 = arith.subf %200, %203 : vector<5x5xf32>
    %205 = math.exp %204 : vector<5x5xf32>
    %cst_102 = arith.constant dense<0.000000e+00> : vector<5xf32>
    %206 = vector.multi_reduction <add>, %205, %cst_102 [1] : vector<5x5xf32> to vector<5xf32>
    %207 = vector.shape_cast %206 : vector<5xf32> to vector<5x1xf32>
    %208 = vector.broadcast %207 : vector<5x1xf32> to vector<5x5xf32>
    %209 = arith.divf %205, %208 : vector<5x5xf32>
    %cst_103 = arith.constant dense<0.000000e+00> : vector<5x8xf32>
    %210 = tpu.matmul %209, %199, %cst_103 {dimension_numbers = #tpu.dot_dimension_numbers<[1], [0], [0], [1], [0, 0, 1, 1], [], []>} : vector<5x5xf32>, vector<5x8xf32>, vector<5x8xf32> -> vector<5x8xf32>
    %211 = vector.extract_strided_slice %194 {offsets = [0, 8], sizes = [5, 8], strides = [1, 1]} : vector<5x32xf32> to vector<5x8xf32>
    %212 = vector.extract_strided_slice %195 {offsets = [0, 8], sizes = [5, 8], strides = [1, 1]} : vector<5x32xf32> to vector<5x8xf32>
    %213 = vector.extract_strided_slice %196 {offsets = [0, 8], sizes = [5, 8], strides = [1, 1]} : vector<5x32xf32> to vector<5x8xf32>
    %cst_104 = arith.constant dense<0.000000e+00> : vector<5x5xf32>
    %214 = tpu.matmul %211, %212, %cst_104 {dimension_numbers = #tpu.dot_dimension_numbers<[1], [1], [0], [0], [0, 0, 1, 0], [], []>} : vector<5x8xf32>, vector<5x8xf32>, vector<5x5xf32> -> vector<5x5xf32>
    %cst_105 = arith.constant dense<0xFF800000> : vector<5xf32>
    %215 = vector.multi_reduction <maximumf>, %214, %cst_105 [1] : vector<5x5xf32> to vector<5xf32>
    %216 = vector.shape_cast %215 : vector<5xf32> to vector<5x1xf32>
    %217 = vector.broadcast %216 : vector<5x1xf32> to vector<5x5xf32>
    %218 = arith.subf %214, %217 : vector<5x5xf32>
    %219 = math.exp %218 : vector<5x5xf32>
    %cst_106 = arith.constant dense<0.000000e+00> : vector<5xf32>
    %220 = vector.multi_reduction <add>, %219, %cst_106 [1] : vector<5x5xf32> to vector<5xf32>
    %221 = vector.shape_cast %220 : vector<5xf32> to vector<5x1xf32>
    %222 = vector.broadcast %221 : vector<5x1xf32> to vector<5x5xf32>
    %223 = arith.divf %219, %222 : vector<5x5xf32>
    %cst_107 = arith.constant dense<0.000000e+00> : vector<5x8xf32>
    %224 = tpu.matmul %223, %213, %cst_107 {dimension_numbers = #tpu.dot_dimension_numbers<[1], [0], [0], [1], [0, 0, 1, 1], [], []>} : vector<5x5xf32>, vector<5x8xf32>, vector<5x8xf32> -> vector<5x8xf32>
    %225 = vector.extract_strided_slice %194 {offsets = [0, 16], sizes = [5, 8], strides = [1, 1]} : vector<5x32xf32> to vector<5x8xf32>
    %226 = vector.extract_strided_slice %195 {offsets = [0, 16], sizes = [5, 8], strides = [1, 1]} : vector<5x32xf32> to vector<5x8xf32>
    %227 = vector.extract_strided_slice %196 {offsets = [0, 16], sizes = [5, 8], strides = [1, 1]} : vector<5x32xf32> to vector<5x8xf32>
    %cst_108 = arith.constant dense<0.000000e+00> : vector<5x5xf32>
    %228 = tpu.matmul %225, %226, %cst_108 {dimension_numbers = #tpu.dot_dimension_numbers<[1], [1], [0], [0], [0, 0, 1, 0], [], []>} : vector<5x8xf32>, vector<5x8xf32>, vector<5x5xf32> -> vector<5x5xf32>
    %cst_109 = arith.constant dense<0xFF800000> : vector<5xf32>
    %229 = vector.multi_reduction <maximumf>, %228, %cst_109 [1] : vector<5x5xf32> to vector<5xf32>
    %230 = vector.shape_cast %229 : vector<5xf32> to vector<5x1xf32>
    %231 = vector.broadcast %230 : vector<5x1xf32> to vector<5x5xf32>
    %232 = arith.subf %228, %231 : vector<5x5xf32>
    %233 = math.exp %232 : vector<5x5xf32>
    %cst_110 = arith.constant dense<0.000000e+00> : vector<5xf32>
    %234 = vector.multi_reduction <add>, %233, %cst_110 [1] : vector<5x5xf32> to vector<5xf32>
    %235 = vector.shape_cast %234 : vector<5xf32> to vector<5x1xf32>
    %236 = vector.broadcast %235 : vector<5x1xf32> to vector<5x5xf32>
    %237 = arith.divf %233, %236 : vector<5x5xf32>
    %cst_111 = arith.constant dense<0.000000e+00> : vector<5x8xf32>
    %238 = tpu.matmul %237, %227, %cst_111 {dimension_numbers = #tpu.dot_dimension_numbers<[1], [0], [0], [1], [0, 0, 1, 1], [], []>} : vector<5x5xf32>, vector<5x8xf32>, vector<5x8xf32> -> vector<5x8xf32>
    %239 = vector.extract_strided_slice %194 {offsets = [0, 24], sizes = [5, 8], strides = [1, 1]} : vector<5x32xf32> to vector<5x8xf32>
    %240 = vector.extract_strided_slice %195 {offsets = [0, 24], sizes = [5, 8], strides = [1, 1]} : vector<5x32xf32> to vector<5x8xf32>
    %241 = vector.extract_strided_slice %196 {offsets = [0, 24], sizes = [5, 8], strides = [1, 1]} : vector<5x32xf32> to vector<5x8xf32>
    %cst_112 = arith.constant dense<0.000000e+00> : vector<5x5xf32>
    %242 = tpu.matmul %239, %240, %cst_112 {dimension_numbers = #tpu.dot_dimension_numbers<[1], [1], [0], [0], [0, 0, 1, 0], [], []>} : vector<5x8xf32>, vector<5x8xf32>, vector<5x5xf32> -> vector<5x5xf32>
    %cst_113 = arith.constant dense<0xFF800000> : vector<5xf32>
    %243 = vector.multi_reduction <maximumf>, %242, %cst_113 [1] : vector<5x5xf32> to vector<5xf32>
    %244 = vector.shape_cast %243 : vector<5xf32> to vector<5x1xf32>
    %245 = vector.broadcast %244 : vector<5x1xf32> to vector<5x5xf32>
    %246 = arith.subf %242, %245 : vector<5x5xf32>
    %247 = math.exp %246 : vector<5x5xf32>
    %cst_114 = arith.constant dense<0.000000e+00> : vector<5xf32>
    %248 = vector.multi_reduction <add>, %247, %cst_114 [1] : vector<5x5xf32> to vector<5xf32>
    %249 = vector.shape_cast %248 : vector<5xf32> to vector<5x1xf32>
    %250 = vector.broadcast %249 : vector<5x1xf32> to vector<5x5xf32>
    %251 = arith.divf %247, %250 : vector<5x5xf32>
    %cst_115 = arith.constant dense<0.000000e+00> : vector<5x8xf32>
    %252 = tpu.matmul %251, %241, %cst_115 {dimension_numbers = #tpu.dot_dimension_numbers<[1], [0], [0], [1], [0, 0, 1, 1], [], []>} : vector<5x5xf32>, vector<5x8xf32>, vector<5x8xf32> -> vector<5x8xf32>
    %253 = tpu.concatenate %210, %224, %238, %252 in 1 : vector<5x8xf32>, vector<5x8xf32>, vector<5x8xf32>, vector<5x8xf32> -> vector<5x32xf32>
    %c1_116 = arith.constant 1 : index
    %c0_117 = arith.constant 0 : index
    %c0_118 = arith.constant 0 : index
    %254 = vector.load %arg10[%c1_116, %c0_117, %c0_118] : memref<2x32x32xf32, #tpu.memory_space<vmem>>, vector<1x32x32xf32>
    %255 = vector.shape_cast %254 : vector<1x32x32xf32> to vector<32x32xf32>
    %cst_119 = arith.constant dense<0.000000e+00> : vector<5x32xf32>
    %256 = tpu.matmul %253, %255, %cst_119 {dimension_numbers = #tpu.dot_dimension_numbers<[1], [0], [0], [1], [0, 0, 1, 1], [], []>} : vector<5x32xf32>, vector<32x32xf32>, vector<5x32xf32> -> vector<5x32xf32>
    %257 = arith.addf %160, %256 : vector<5x32xf32>
    %c1_120 = arith.constant 1 : index
    %c0_121 = arith.constant 0 : index
    %c0_122 = arith.constant 0 : index
    %258 = vector.load %arg11[%c1_120, %c0_121, %c0_122] : memref<2x1x32xf32, #tpu.memory_space<vmem>>, vector<1x1x32xf32>
    %259 = vector.shape_cast %258 : vector<1x1x32xf32> to vector<1x32xf32>
    %260 = vector.broadcast %259 : vector<1x32xf32> to vector<5x32xf32>
    %261 = arith.addf %257, %260 : vector<5x32xf32>
    %c1_123 = arith.constant 1 : index
    %c0_124 = arith.constant 0 : index
    %c0_125 = arith.constant 0 : index
    %262 = vector.load %arg12[%c1_123, %c0_124, %c0_125] : memref<2x1x32xf32, #tpu.memory_space<vmem>>, vector<1x1x32xf32>
    %263 = vector.shape_cast %262 : vector<1x1x32xf32> to vector<1x32xf32>
    %c1_126 = arith.constant 1 : index
    %c0_127 = arith.constant 0 : index
    %c0_128 = arith.constant 0 : index
    %264 = vector.load %arg13[%c1_126, %c0_127, %c0_128] : memref<2x1x32xf32, #tpu.memory_space<vmem>>, vector<1x1x32xf32>
    %265 = vector.shape_cast %264 : vector<1x1x32xf32> to vector<1x32xf32>
    %cst_129 = arith.constant dense<0.000000e+00> : vector<5xf32>
    %266 = vector.multi_reduction <add>, %261, %cst_129 [1] : vector<5x32xf32> to vector<5xf32>
    %267 = vector.shape_cast %266 : vector<5xf32> to vector<5x1xf32>
    %cst_130 = arith.constant 3.200000e+01 : f32
    %268 = vector.broadcast %cst_130 : f32 to vector<5x1xf32>
    %269 = arith.divf %267, %268 : vector<5x1xf32>
    %270 = vector.broadcast %269 : vector<5x1xf32> to vector<5x32xf32>
    %271 = arith.subf %261, %270 : vector<5x32xf32>
    %272 = arith.mulf %271, %271 : vector<5x32xf32>
    %cst_131 = arith.constant dense<0.000000e+00> : vector<5xf32>
    %273 = vector.multi_reduction <add>, %272, %cst_131 [1] : vector<5x32xf32> to vector<5xf32>
    %274 = vector.shape_cast %273 : vector<5xf32> to vector<5x1xf32>
    %cst_132 = arith.constant 3.200000e+01 : f32
    %275 = vector.broadcast %cst_132 : f32 to vector<5x1xf32>
    %276 = arith.divf %274, %275 : vector<5x1xf32>
    %cst_133 = arith.constant 9.99999997E-7 : f32
    %277 = vector.broadcast %cst_133 : f32 to vector<5x1xf32>
    %278 = arith.addf %276, %277 : vector<5x1xf32>
    %279 = math.rsqrt %278 : vector<5x1xf32>
    %280 = vector.broadcast %279 : vector<5x1xf32> to vector<5x32xf32>
    %281 = arith.mulf %271, %280 : vector<5x32xf32>
    %282 = vector.broadcast %263 : vector<1x32xf32> to vector<5x32xf32>
    %283 = arith.mulf %281, %282 : vector<5x32xf32>
    %284 = vector.broadcast %265 : vector<1x32xf32> to vector<5x32xf32>
    %285 = arith.addf %283, %284 : vector<5x32xf32>
    %c1_134 = arith.constant 1 : index
    %c0_135 = arith.constant 0 : index
    %c0_136 = arith.constant 0 : index
    %286 = vector.load %arg14[%c1_134, %c0_135, %c0_136] : memref<2x32x128xf32, #tpu.memory_space<vmem>>, vector<1x32x128xf32>
    %287 = vector.shape_cast %286 : vector<1x32x128xf32> to vector<32x128xf32>
    %cst_137 = arith.constant dense<0.000000e+00> : vector<5x128xf32>
    %288 = tpu.matmul %285, %287, %cst_137 {dimension_numbers = #tpu.dot_dimension_numbers<[1], [0], [0], [1], [0, 0, 1, 1], [], []>} : vector<5x32xf32>, vector<32x128xf32>, vector<5x128xf32> -> vector<5x128xf32>
    %c1_138 = arith.constant 1 : index
    %c0_139 = arith.constant 0 : index
    %c0_140 = arith.constant 0 : index
    %289 = vector.load %arg15[%c1_138, %c0_139, %c0_140] : memref<2x1x128xf32, #tpu.memory_space<vmem>>, vector<1x1x128xf32>
    %290 = vector.shape_cast %289 : vector<1x1x128xf32> to vector<1x128xf32>
    %291 = vector.broadcast %290 : vector<1x128xf32> to vector<5x128xf32>
    %292 = arith.addf %288, %291 : vector<5x128xf32>
    %cst_141 = arith.constant 5.000000e-01 : f32
    %293 = vector.broadcast %cst_141 : f32 to vector<5x128xf32>
    %294 = arith.mulf %293, %292 : vector<5x128xf32>
    %cst_142 = arith.constant 0.707106769 : f32
    %295 = vector.broadcast %cst_142 : f32 to vector<5x128xf32>
    %296 = arith.mulf %292, %295 : vector<5x128xf32>
    %297 = math.erf %296 : vector<5x128xf32>
    %cst_143 = arith.constant 1.000000e+00 : f32
    %298 = vector.broadcast %cst_143 : f32 to vector<5x128xf32>
    %299 = arith.addf %298, %297 : vector<5x128xf32>
    %300 = arith.mulf %294, %299 : vector<5x128xf32>
    %c1_144 = arith.constant 1 : index
    %c0_145 = arith.constant 0 : index
    %c0_146 = arith.constant 0 : index
    %301 = vector.load %arg16[%c1_144, %c0_145, %c0_146] : memref<2x128x32xf32, #tpu.memory_space<vmem>>, vector<1x128x32xf32>
    %302 = vector.shape_cast %301 : vector<1x128x32xf32> to vector<128x32xf32>
    %cst_147 = arith.constant dense<0.000000e+00> : vector<5x32xf32>
    %303 = tpu.matmul %300, %302, %cst_147 {dimension_numbers = #tpu.dot_dimension_numbers<[1], [0], [0], [1], [0, 0, 1, 1], [], []>} : vector<5x128xf32>, vector<128x32xf32>, vector<5x32xf32> -> vector<5x32xf32>
    %304 = arith.addf %261, %303 : vector<5x32xf32>
    %c1_148 = arith.constant 1 : index
    %c0_149 = arith.constant 0 : index
    %c0_150 = arith.constant 0 : index
    %305 = vector.load %arg17[%c1_148, %c0_149, %c0_150] : memref<2x1x32xf32, #tpu.memory_space<vmem>>, vector<1x1x32xf32>
    %306 = vector.shape_cast %305 : vector<1x1x32xf32> to vector<1x32xf32>
    %307 = vector.broadcast %306 : vector<1x32xf32> to vector<5x32xf32>
    %308 = arith.addf %304, %307 : vector<5x32xf32>
    %309 = vector.extract_strided_slice %308 {offsets = [0, 0], sizes = [1, 32], strides = [1, 1]} : vector<5x32xf32> to vector<1x32xf32>
    %c0_151 = arith.constant 0 : index
    %c0_152 = arith.constant 0 : index
    %310 = vector.load %arg18[%c0_151, %c0_152] : memref<1x32xf32, #tpu.memory_space<vmem>>, vector<1x32xf32>
    %c0_153 = arith.constant 0 : index
    %c0_154 = arith.constant 0 : index
    %311 = vector.load %arg19[%c0_153, %c0_154] : memref<1x32xf32, #tpu.memory_space<vmem>>, vector<1x32xf32>
    %cst_155 = arith.constant dense<0.000000e+00> : vector<1xf32>
    %312 = vector.multi_reduction <add>, %309, %cst_155 [1] : vector<1x32xf32> to vector<1xf32>
    %313 = vector.shape_cast %312 : vector<1xf32> to vector<1x1xf32>
    %cst_156 = arith.constant 3.200000e+01 : f32
    %314 = vector.broadcast %cst_156 : f32 to vector<1x1xf32>
    %315 = arith.divf %313, %314 : vector<1x1xf32>
    %316 = vector.broadcast %315 : vector<1x1xf32> to vector<1x32xf32>
    %317 = arith.subf %309, %316 : vector<1x32xf32>
    %318 = arith.mulf %317, %317 : vector<1x32xf32>
    %cst_157 = arith.constant dense<0.000000e+00> : vector<1xf32>
    %319 = vector.multi_reduction <add>, %318, %cst_157 [1] : vector<1x32xf32> to vector<1xf32>
    %320 = vector.shape_cast %319 : vector<1xf32> to vector<1x1xf32>
    %cst_158 = arith.constant 3.200000e+01 : f32
    %321 = vector.broadcast %cst_158 : f32 to vector<1x1xf32>
    %322 = arith.divf %320, %321 : vector<1x1xf32>
    %cst_159 = arith.constant 9.99999997E-7 : f32
    %323 = vector.broadcast %cst_159 : f32 to vector<1x1xf32>
    %324 = arith.addf %322, %323 : vector<1x1xf32>
    %325 = math.rsqrt %324 : vector<1x1xf32>
    %326 = vector.broadcast %325 : vector<1x1xf32> to vector<1x32xf32>
    %327 = arith.mulf %317, %326 : vector<1x32xf32>
    %328 = arith.mulf %327, %310 : vector<1x32xf32>
    %329 = arith.addf %328, %311 : vector<1x32xf32>
    %c0_160 = arith.constant 0 : index
    %c0_161 = arith.constant 0 : index
    %330 = vector.load %arg20[%c0_160, %c0_161] : memref<32x16xf32, #tpu.memory_space<vmem>>, vector<32x16xf32>
    %cst_162 = arith.constant dense<0.000000e+00> : vector<1x16xf32>
    %331 = tpu.matmul %329, %330, %cst_162 {dimension_numbers = #tpu.dot_dimension_numbers<[1], [0], [0], [1], [0, 0, 1, 1], [], []>} : vector<1x32xf32>, vector<32x16xf32>, vector<1x16xf32> -> vector<1x16xf32>
    %c0_163 = arith.constant 0 : index
    %c0_164 = arith.constant 0 : index
    %332 = vector.load %arg21[%c0_163, %c0_164] : memref<1x16xf32, #tpu.memory_space<vmem>>, vector<1x16xf32>
    %333 = arith.addf %331, %332 : vector<1x16xf32>
    %c0_165 = arith.constant 0 : index
    %c0_166 = arith.constant 0 : index
    %c0_167 = arith.constant 0 : index
    %334 = vector.load %arg22[%c0_165, %c0_166, %c0_167] : memref<1x1x16xf32, #tpu.memory_space<vmem>>, vector<1x1x16xf32>
    %335 = vector.shape_cast %334 : vector<1x1x16xf32> to vector<1x16xf32>
    %336 = vector.shape_cast %333 : vector<1x16xf32> to vector<1x1x16xf32>
    tpu.vector_store %arg22[%c0_165, %c0_166, %c0_167], %336 {strides = array<i32>} : memref<1x1x16xf32, #tpu.memory_space<vmem>>, vector<1x1x16xf32>,
    return
  }
  func.func @transform_0(%arg0: i32) -> (i32, i32, i32) {
    %c0_i32 = arith.constant 0 : i32
    %c0_i32_0 = arith.constant 0 : i32
    %c0_i32_1 = arith.constant 0 : i32
    return %arg0, %c0_i32, %c0_i32_0 : i32, i32, i32
  }
  func.func @transform_1(%arg0: i32) -> (i32, i32) {
    %c0_i32 = arith.constant 0 : i32
    %c0_i32_0 = arith.constant 0 : i32
    %c0_i32_1 = arith.constant 0 : i32
    return %c0_i32, %c0_i32_0 : i32, i32
  }
  func.func @transform_2(%arg0: i32) -> (i32, i32) {
    %c0_i32 = arith.constant 0 : i32
    %c0_i32_0 = arith.constant 0 : i32
    %c0_i32_1 = arith.constant 0 : i32
    return %c0_i32, %c0_i32_0 : i32, i32
  }
  func.func @transform_3(%arg0: i32) -> (i32, i32) {
    %c0_i32 = arith.constant 0 : i32
    %c0_i32_0 = arith.constant 0 : i32
    %c0_i32_1 = arith.constant 0 : i32
    return %c0_i32, %c0_i32_0 : i32, i32
  }
  func.func @transform_4(%arg0: i32) -> (i32, i32) {
    %c0_i32 = arith.constant 0 : i32
    %c0_i32_0 = arith.constant 0 : i32
    %c0_i32_1 = arith.constant 0 : i32
    return %c0_i32, %c0_i32_0 : i32, i32
  }
  func.func @transform_5(%arg0: i32) -> (i32, i32, i32) {
    %c0_i32 = arith.constant 0 : i32
    %c0_i32_0 = arith.constant 0 : i32
    %c0_i32_1 = arith.constant 0 : i32
    %c0_i32_2 = arith.constant 0 : i32
    return %c0_i32, %c0_i32_0, %c0_i32_1 : i32, i32, i32
  }
  func.func @transform_6(%arg0: i32) -> (i32, i32, i32) {
    %c0_i32 = arith.constant 0 : i32
    %c0_i32_0 = arith.constant 0 : i32
    %c0_i32_1 = arith.constant 0 : i32
    %c0_i32_2 = arith.constant 0 : i32
    return %c0_i32, %c0_i32_0, %c0_i32_1 : i32, i32, i32
  }
  func.func @transform_7(%arg0: i32) -> (i32, i32, i32) {
    %c0_i32 = arith.constant 0 : i32
    %c0_i32_0 = arith.constant 0 : i32
    %c0_i32_1 = arith.constant 0 : i32
    %c0_i32_2 = arith.constant 0 : i32
    return %c0_i32, %c0_i32_0, %c0_i32_1 : i32, i32, i32
  }
  func.func @transform_8(%arg0: i32) -> (i32, i32, i32) {
    %c0_i32 = arith.constant 0 : i32
    %c0_i32_0 = arith.constant 0 : i32
    %c0_i32_1 = arith.constant 0 : i32
    %c0_i32_2 = arith.constant 0 : i32
    return %c0_i32, %c0_i32_0, %c0_i32_1 : i32, i32, i32
  }
  func.func @transform_9(%arg0: i32) -> (i32, i32, i32) {
    %c0_i32 = arith.constant 0 : i32
    %c0_i32_0 = arith.constant 0 : i32
    %c0_i32_1 = arith.constant 0 : i32
    %c0_i32_2 = arith.constant 0 : i32
    return %c0_i32, %c0_i32_0, %c0_i32_1 : i32, i32, i32
  }
  func.func @transform_10(%arg0: i32) -> (i32, i32, i32) {
    %c0_i32 = arith.constant 0 : i32
    %c0_i32_0 = arith.constant 0 : i32
    %c0_i32_1 = arith.constant 0 : i32
    %c0_i32_2 = arith.constant 0 : i32
    return %c0_i32, %c0_i32_0, %c0_i32_1 : i32, i32, i32
  }
  func.func @transform_11(%arg0: i32) -> (i32, i32, i32) {
    %c0_i32 = arith.constant 0 : i32
    %c0_i32_0 = arith.constant 0 : i32
    %c0_i32_1 = arith.constant 0 : i32
    %c0_i32_2 = arith.constant 0 : i32
    return %c0_i32, %c0_i32_0, %c0_i32_1 : i32, i32, i32
  }
  func.func @transform_12(%arg0: i32) -> (i32, i32, i32) {
    %c0_i32 = arith.constant 0 : i32
    %c0_i32_0 = arith.constant 0 : i32
    %c0_i32_1 = arith.constant 0 : i32
    %c0_i32_2 = arith.constant 0 : i32
    return %c0_i32, %c0_i32_0, %c0_i32_1 : i32, i32, i32
  }
  func.func @transform_13(%arg0: i32) -> (i32, i32, i32) {
    %c0_i32 = arith.constant 0 : i32
    %c0_i32_0 = arith.constant 0 : i32
    %c0_i32_1 = arith.constant 0 : i32
    %c0_i32_2 = arith.constant 0 : i32
    return %c0_i32, %c0_i32_0, %c0_i32_1 : i32, i32, i32
  }
  func.func @transform_14(%arg0: i32) -> (i32, i32, i32) {
    %c0_i32 = arith.constant 0 : i32
    %c0_i32_0 = arith.constant 0 : i32
    %c0_i32_1 = arith.constant 0 : i32
    %c0_i32_2 = arith.constant 0 : i32
    return %c0_i32, %c0_i32_0, %c0_i32_1 : i32, i32, i32
  }
  func.func @transform_15(%arg0: i32) -> (i32, i32, i32) {
    %c0_i32 = arith.constant 0 : i32
    %c0_i32_0 = arith.constant 0 : i32
    %c0_i32_1 = arith.constant 0 : i32
    %c0_i32_2 = arith.constant 0 : i32
    return %c0_i32, %c0_i32_0, %c0_i32_1 : i32, i32, i32
  }
  func.func @transform_16(%arg0: i32) -> (i32, i32, i32) {
    %c0_i32 = arith.constant 0 : i32
    %c0_i32_0 = arith.constant 0 : i32
    %c0_i32_1 = arith.constant 0 : i32
    %c0_i32_2 = arith.constant 0 : i32
    return %c0_i32, %c0_i32_0, %c0_i32_1 : i32, i32, i32
  }
  func.func @transform_17(%arg0: i32) -> (i32, i32) {
    %c0_i32 = arith.constant 0 : i32
    %c0_i32_0 = arith.constant 0 : i32
    %c0_i32_1 = arith.constant 0 : i32
    return %c0_i32, %c0_i32_0 : i32, i32
  }
  func.func @transform_18(%arg0: i32) -> (i32, i32) {
    %c0_i32 = arith.constant 0 : i32
    %c0_i32_0 = arith.constant 0 : i32
    %c0_i32_1 = arith.constant 0 : i32
    return %c0_i32, %c0_i32_0 : i32, i32
  }
  func.func @transform_19(%arg0: i32) -> (i32, i32) {
    %c0_i32 = arith.constant 0 : i32
    %c0_i32_0 = arith.constant 0 : i32
    %c0_i32_1 = arith.constant 0 : i32
    return %c0_i32, %c0_i32_0 : i32, i32
  }
  func.func @transform_20(%arg0: i32) -> (i32, i32) {
    %c0_i32 = arith.constant 0 : i32
    %c0_i32_0 = arith.constant 0 : i32
    %c0_i32_1 = arith.constant 0 : i32
    return %c0_i32, %c0_i32_0 : i32, i32
  }
  func.func @transform_21(%arg0: i32) -> (i32, i32, i32) {
    %c0_i32 = arith.constant 0 : i32
    %c0_i32_0 = arith.constant 0 : i32
    %c0_i32_1 = arith.constant 0 : i32
    return %arg0, %c0_i32, %c0_i32_0 : i32, i32, i32
  }
}

</mosaic_0001>

<llo_original>
// kernel: vit_forward.1
$region0: #{vit_forward.1}
  #allocation0 [shape = 'u32[]', space=smem, size = 0x4, offset = 0x4, fixed_abs, tag = 'smem constant byte address 0x4 - core index']
  #allocation1 [shape = 'u32[72,128]{1,0:T(1,128)}', space=vmem, size = 0x9000, scoped, tag = 'internal scratch']
  %s0 = inlined_call_operand.vmem [shape: f32[2,4,768], index: 0, kind: input, shape index: {}]
  %s1 = inlined_call_operand.vmem [shape: f32[768,32], index: 1, kind: input, shape index: {}]
  %s2 = inlined_call_operand.vmem [shape: f32[1,32], index: 2, kind: input, shape index: {}]
  %s3 = inlined_call_operand.vmem [shape: f32[1,32], index: 3, kind: input, shape index: {}]
  %s4 = inlined_call_operand.vmem [shape: f32[5,32], index: 4, kind: input, shape index: {}]
  %s5 = inlined_call_operand.vmem [shape: f32[2,1,32], index: 5, kind: input, shape index: {}]
  %s6 = inlined_call_operand.vmem [shape: f32[2,1,32], index: 6, kind: input, shape index: {}]
  %s7 = inlined_call_operand.vmem [shape: f32[2,32,96], index: 7, kind: input, shape index: {}]
  %s8 = inlined_call_operand.vmem [shape: f32[2,1,96], index: 8, kind: input, shape index: {}]
  %s9 = inlined_call_operand.vmem [shape: f32[2,32,32], index: 9, kind: input, shape index: {}]
  %s10 = inlined_call_operand.vmem [shape: f32[2,1,32], index: 10, kind: input, shape index: {}]
  %s11 = inlined_call_operand.vmem [shape: f32[2,1,32], index: 11, kind: input, shape index: {}]
  %s12 = inlined_call_operand.vmem [shape: f32[2,1,32], index: 12, kind: input, shape index: {}]
  %s13 = inlined_call_operand.vmem [shape: f32[2,32,128], index: 13, kind: input, shape index: {}]
  %s14 = inlined_call_operand.vmem [shape: f32[2,1,128], index: 14, kind: input, shape index: {}]
  %s15 = inlined_call_operand.vmem [shape: f32[2,128,32], index: 15, kind: input, shape index: {}]
  %s16 = inlined_call_operand.vmem [shape: f32[2,1,32], index: 16, kind: input, shape index: {}]
  %s17 = inlined_call_operand.vmem [shape: f32[1,32], index: 17, kind: input, shape index: {}]
  %s18 = inlined_call_operand.vmem [shape: f32[1,32], index: 18, kind: input, shape index: {}]
  %s19 = inlined_call_operand.vmem [shape: f32[32,16], index: 19, kind: input, shape index: {}]
  %s20 = inlined_call_operand.vmem [shape: f32[1,16], index: 20, kind: input, shape index: {}]
  %s21 = inlined_call_operand.hbm [shape: f32[2,1,16], index: 21, kind: output, shape index: {}]
  %s22 = sld [smem:[#allocation0]]
  $region117: #{vit_forward.1} parent=0
    _
  %s24 = ssub.s32 1, %s22
  %s25 = scalar_select 0, %s24, %s22
  $region1: #{vit_forward.1} parent=0
    #allocation2 [shape = 'u8[1024]{0}', space=vmem, size = 0x400, scoped, tag = 'output window, operand 0']
    #allocation3 [shape = 's32[2]{0}', space=sflag, size = 0x8, scoped, tag = 'scoped memory for vit_forward.1']
    %26 = vsyncpa [#allocation3], 0
    %s27 = scalar_lea.sflag [#allocation3], 1
    %28 = vsyncpa %s27, 0
    loop: start=0, step=1, limit=4
    $region2: #{vit_forward.1} parent=1 // loop_pre_header
      _
    $region3: #{vit_forward.1} parent=1 // loop_header
      %s30 = sphi 0, %s34
      %p31 = scmp.ge.s32.totalorder %s30, 4
      %s40 = sphi 0, %s42
      %s43 = sphi 0, %s40
      %s44 = sphi 0, %s43
      %s60 = sphi 0, %s44
      %s64 = sphi 0, %s64
      %s66 = sphi 0, %s64
      %s67 = sphi 0, %s66
      %s81 = sphi 0, %s67
      %s85 = sphi 0, %s85
      %s87 = sphi 0, %s85
      %s88 = sphi 0, %s87
      %s102 = sphi 0, %s88
      %s106 = sphi 0, %s106
      %s108 = sphi 0, %s106
      %s109 = sphi 0, %s108
      %s123 = sphi 0, %s109
      %s127 = sphi 0, %s127
      %s129 = sphi 0, %s127
      %s130 = sphi 0, %s129
      %s144 = sphi 0, %s130
      %s148 = sphi 0, %s148
      %s150 = sphi 0, %s148
      %s151 = sphi 0, %s150
      %s165 = sphi 0, %s151
      %s169 = sphi 0, %s169
      %s171 = sphi 0, %s169
      %s172 = sphi 0, %s171
      %s186 = sphi 0, %s172
      %s190 = sphi 0, %s190
      %s192 = sphi 0, %s190
      %s193 = sphi 0, %s192
      %s207 = sphi 0, %s193
      %s211 = sphi 0, %s211
      %s213 = sphi 0, %s211
      %s214 = sphi 0, %s213
      %s228 = sphi 0, %s214
      %s232 = sphi 0, %s232
      %s234 = sphi 0, %s232
      %s235 = sphi 0, %s234
      %s249 = sphi 0, %s235
      %s253 = sphi 0, %s253
      %s255 = sphi 0, %s253
      %s256 = sphi 0, %s255
      %s270 = sphi 0, %s256
      %s274 = sphi 0, %s274
      %s276 = sphi 0, %s274
      %s277 = sphi 0, %s276
      %s291 = sphi 0, %s277
      %s295 = sphi 0, %s295
      %s297 = sphi 0, %s295
      %s298 = sphi 0, %s297
      %s312 = sphi 0, %s298
      %s316 = sphi 0, %s316
      %s318 = sphi 0, %s316
      %s319 = sphi 0, %s318
      %s333 = sphi 0, %s319
      %s337 = sphi 0, %s337
      %s339 = sphi 0, %s337
      %s340 = sphi 0, %s339
      %s354 = sphi 0, %s340
      %s358 = sphi 0, %s358
      %s360 = sphi 0, %s358
      %s361 = sphi 0, %s360
      %s375 = sphi 0, %s361
      %s379 = sphi 0, %s379
      %s381 = sphi 0, %s379
      %s382 = sphi 0, %s381
      %s396 = sphi 0, %s382
      %s400 = sphi 0, %s400
      %s402 = sphi 0, %s400
      %s403 = sphi 0, %s402
      %s417 = sphi 0, %s403
      %s421 = sphi 0, %s421
      %s423 = sphi 0, %s421
      %s424 = sphi 0, %s423
      %s438 = sphi 0, %s424
      %s442 = sphi 0, %s442
      %s444 = sphi 0, %s442
      %s445 = sphi 0, %s444
      %s459 = sphi 0, %s445
      %s463 = sphi 0, %s463
      %s465 = sphi 0, %s463
      %s466 = sphi 0, %s465
      %s480 = sphi 0, %s466
      %s486 = sphi 0, %s488
      %s489 = sphi 0, %s486
      %s490 = sphi 0, %s489
      %s506 = sphi 0, %s490
    $region4: #{vit_forward.1} parent=1 // loop_header_branch
      %33 = sbr.rel (%p31) target = $region8
    $region5: #{vit_forward.1} parent=1 // loop_body
      %s35 = ssub.s32 %s30, 1
      %s36 = ssub.s32 %s30, 2
      %s37 = sadd.s32 %s30, 1
      %s38 = ssub.s32 %s30, %s37
      %p39 = scmp.eq.s32.totalorder %s38, 0
      %s41 = sadd.s32 %s40, 1
      %s42 = scalar_select %p39, %s40, %s41
      %p45 = pneg %p39
      %p46 = scmp.eq.s32.totalorder %s30, 1
      %p47 = por %p45, %p46
      %p48 = scmp.ne.s32.totalorder %s40, %s43
      %p49 = scmp.eq.s32.totalorder %s30, 0
      %p50 = por %p48, %p49
      %p51 = scmp.ne.s32.totalorder %s40, %s43
      %p52 = scmp.eq.s32.totalorder %s35, 1
      %p53 = por %p51, %p52
      %p54 = scmp.ne.s32.totalorder %s43, %s44
      %p55 = scmp.eq.s32.totalorder %s35, 0
      %p56 = por %p54, %p55
      %p57 = scmp.ne.s32.totalorder %s43, %s44
      %p58 = scmp.eq.s32.totalorder %s36, 1
      %p59 = por %p57, %p58
      %p61 = scmp.ne.s32.totalorder %s44, %s60
      %p62 = scmp.eq.s32.totalorder %s36, 0
      %p63 = por %p61, %p62
      %s65 = sadd.s32 %s64, 1
      %p68 = scmp.eq.s32.totalorder %s30, 1
      %p69 = scmp.ne.s32.totalorder %s64, %s66
      %p70 = scmp.eq.s32.totalorder %s30, 0
      %p71 = por %p69, %p70
      %p72 = scmp.ne.s32.totalorder %s64, %s66
      %p73 = scmp.eq.s32.totalorder %s35, 1
      %p74 = por %p72, %p73
      %p75 = scmp.ne.s32.totalorder %s66, %s67
      %p76 = scmp.eq.s32.totalorder %s35, 0
      %p77 = por %p75, %p76
      %p78 = scmp.ne.s32.totalorder %s66, %s67
      %p79 = scmp.eq.s32.totalorder %s36, 1
      %p80 = por %p78, %p79
      %p82 = scmp.ne.s32.totalorder %s67, %s81
      %p83 = scmp.eq.s32.totalorder %s36, 0
      %p84 = por %p82, %p83
      %s86 = sadd.s32 %s85, 1
      %p89 = scmp.eq.s32.totalorder %s30, 1
      %p90 = scmp.ne.s32.totalorder %s85, %s87
      %p91 = scmp.eq.s32.totalorder %s30, 0
      %p92 = por %p90, %p91
      %p93 = scmp.ne.s32.totalorder %s85, %s87
      %p94 = scmp.eq.s32.totalorder %s35, 1
      %p95 = por %p93, %p94
      %p96 = scmp.ne.s32.totalorder %s87, %s88
      %p97 = scmp.eq.s32.totalorder %s35, 0
      %p98 = por %p96, %p97
      %p99 = scmp.ne.s32.totalorder %s87, %s88
      %p100 = scmp.eq.s32.totalorder %s36, 1
      %p101 = por %p99, %p100
      %p103 = scmp.ne.s32.totalorder %s88, %s102
      %p104 = scmp.eq.s32.totalorder %s36, 0
      %p105 = por %p103, %p104
      %s107 = sadd.s32 %s106, 1
      %p110 = scmp.eq.s32.totalorder %s30, 1
      %p111 = scmp.ne.s32.totalorder %s106, %s108
      %p112 = scmp.eq.s32.totalorder %s30, 0
      %p113 = por %p111, %p112
      %p114 = scmp.ne.s32.totalorder %s106, %s108
      %p115 = scmp.eq.s32.totalorder %s35, 1
      %p116 = por %p114, %p115
      %p117 = scmp.ne.s32.totalorder %s108, %s109
      %p118 = scmp.eq.s32.totalorder %s35, 0
      %p119 = por %p117, %p118
      %p120 = scmp.ne.s32.totalorder %s108, %s109
      %p121 = scmp.eq.s32.totalorder %s36, 1
      %p122 = por %p120, %p121
      %p124 = scmp.ne.s32.totalorder %s109, %s123
      %p125 = scmp.eq.s32.totalorder %s36, 0
      %p126 = por %p124, %p125
      %s128 = sadd.s32 %s127, 1
      %p131 = scmp.eq.s32.totalorder %s30, 1
      %p132 = scmp.ne.s32.totalorder %s127, %s129
      %p133 = scmp.eq.s32.totalorder %s30, 0
      %p134 = por %p132, %p133
      %p135 = scmp.ne.s32.totalorder %s127, %s129
      %p136 = scmp.eq.s32.totalorder %s35, 1
      %p137 = por %p135, %p136
      %p138 = scmp.ne.s32.totalorder %s129, %s130
      %p139 = scmp.eq.s32.totalorder %s35, 0
      %p140 = por %p138, %p139
      %p141 = scmp.ne.s32.totalorder %s129, %s130
      %p142 = scmp.eq.s32.totalorder %s36, 1
      %p143 = por %p141, %p142
      %p145 = scmp.ne.s32.totalorder %s130, %s144
      %p146 = scmp.eq.s32.totalorder %s36, 0
      %p147 = por %p145, %p146
      %s149 = sadd.s32 %s148, 1
      %p152 = scmp.eq.s32.totalorder %s30, 1
      %p153 = scmp.ne.s32.totalorder %s148, %s150
      %p154 = scmp.eq.s32.totalorder %s30, 0
      %p155 = por %p153, %p154
      %p156 = scmp.ne.s32.totalorder %s148, %s150
      %p157 = scmp.eq.s32.totalorder %s35, 1
      %p158 = por %p156, %p157
      %p159 = scmp.ne.s32.totalorder %s150, %s151
      %p160 = scmp.eq.s32.totalorder %s35, 0
      %p161 = por %p159, %p160
      %p162 = scmp.ne.s32.totalorder %s150, %s151
      %p163 = scmp.eq.s32.totalorder %s36, 1
      %p164 = por %p162, %p163
      %p166 = scmp.ne.s32.totalorder %s151, %s165
      %p167 = scmp.eq.s32.totalorder %s36, 0
      %p168 = por %p166, %p167
      %s170 = sadd.s32 %s169, 1
      %p173 = scmp.eq.s32.totalorder %s30, 1
      %p174 = scmp.ne.s32.totalorder %s169, %s171
      %p175 = scmp.eq.s32.totalorder %s30, 0
      %p176 = por %p174, %p175
      %p177 = scmp.ne.s32.totalorder %s169, %s171
      %p178 = scmp.eq.s32.totalorder %s35, 1
      %p179 = por %p177, %p178
      %p180 = scmp.ne.s32.totalorder %s171, %s172
      %p181 = scmp.eq.s32.totalorder %s35, 0
      %p182 = por %p180, %p181
      %p183 = scmp.ne.s32.totalorder %s171, %s172
      %p184 = scmp.eq.s32.totalorder %s36, 1
      %p185 = por %p183, %p184
      %p187 = scmp.ne.s32.totalorder %s172, %s186
      %p188 = scmp.eq.s32.totalorder %s36, 0
      %p189 = por %p187, %p188
      %s191 = sadd.s32 %s190, 1
      %p194 = scmp.eq.s32.totalorder %s30, 1
      %p195 = scmp.ne.s32.totalorder %s190, %s192
      %p196 = scmp.eq.s32.totalorder %s30, 0
      %p197 = por %p195, %p196
      %p198 = scmp.ne.s32.totalorder %s190, %s192
      %p199 = scmp.eq.s32.totalorder %s35, 1
      %p200 = por %p198, %p199
      %p201 = scmp.ne.s32.totalorder %s192, %s193
      %p202 = scmp.eq.s32.totalorder %s35, 0
      %p203 = por %p201, %p202
      %p204 = scmp.ne.s32.totalorder %s192, %s193
      %p205 = scmp.eq.s32.totalorder %s36, 1
      %p206 = por %p204, %p205
      %p208 = scmp.ne.s32.totalorder %s193, %s207
      %p209 = scmp.eq.s32.totalorder %s36, 0
      %p210 = por %p208, %p209
      %s212 = sadd.s32 %s211, 1
      %p215 = scmp.eq.s32.totalorder %s30, 1
      %p216 = scmp.ne.s32.totalorder %s211, %s213
      %p217 = scmp.eq.s32.totalorder %s30, 0
      %p218 = por %p216, %p217
      %p219 = scmp.ne.s32.totalorder %s211, %s213
      %p220 = scmp.eq.s32.totalorder %s35, 1
      %p221 = por %p219, %p220
      %p222 = scmp.ne.s32.totalorder %s213, %s214
      %p223 = scmp.eq.s32.totalorder %s35, 0
      %p224 = por %p222, %p223
      %p225 = scmp.ne.s32.totalorder %s213, %s214
      %p226 = scmp.eq.s32.totalorder %s36, 1
      %p227 = por %p225, %p226
      %p229 = scmp.ne.s32.totalorder %s214, %s228
      %p230 = scmp.eq.s32.totalorder %s36, 0
      %p231 = por %p229, %p230
      %s233 = sadd.s32 %s232, 1
      %p236 = scmp.eq.s32.totalorder %s30, 1
      %p237 = scmp.ne.s32.totalorder %s232, %s234
      %p238 = scmp.eq.s32.totalorder %s30, 0
      %p239 = por %p237, %p238
      %p240 = scmp.ne.s32.totalorder %s232, %s234
      %p241 = scmp.eq.s32.totalorder %s35, 1
      %p242 = por %p240, %p241
      %p243 = scmp.ne.s32.totalorder %s234, %s235
      %p244 = scmp.eq.s32.totalorder %s35, 0
      %p245 = por %p243, %p244
      %p246 = scmp.ne.s32.totalorder %s234, %s235
      %p247 = scmp.eq.s32.totalorder %s36, 1
      %p248 = por %p246, %p247
      %p250 = scmp.ne.s32.totalorder %s235, %s249
      %p251 = scmp.eq.s32.totalorder %s36, 0
      %p252 = por %p250, %p251
      %s254 = sadd.s32 %s253, 1
      %p257 = scmp.eq.s32.totalorder %s30, 1
      %p258 = scmp.ne.s32.totalorder %s253, %s255
      %p259 = scmp.eq.s32.totalorder %s30, 0
      %p260 = por %p258, %p259
      %p261 = scmp.ne.s32.totalorder %s253, %s255
      %p262 = scmp.eq.s32.totalorder %s35, 1
      %p263 = por %p261, %p262
      %p264 = scmp.ne.s32.totalorder %s255, %s256
      %p265 = scmp.eq.s32.totalorder %s35, 0
      %p266 = por %p264, %p265
      %p267 = scmp.ne.s32.totalorder %s255, %s256
      %p268 = scmp.eq.s32.totalorder %s36, 1
      %p269 = por %p267, %p268
      %p271 = scmp.ne.s32.totalorder %s256, %s270
      %p272 = scmp.eq.s32.totalorder %s36, 0
      %p273 = por %p271, %p272
      %s275 = sadd.s32 %s274, 1
      %p278 = scmp.eq.s32.totalorder %s30, 1
      %p279 = scmp.ne.s32.totalorder %s274, %s276
      %p280 = scmp.eq.s32.totalorder %s30, 0
      %p281 = por %p279, %p280
      %p282 = scmp.ne.s32.totalorder %s274, %s276
      %p283 = scmp.eq.s32.totalorder %s35, 1
      %p284 = por %p282, %p283
      %p285 = scmp.ne.s32.totalorder %s276, %s277
      %p286 = scmp.eq.s32.totalorder %s35, 0
      %p287 = por %p285, %p286
      %p288 = scmp.ne.s32.totalorder %s276, %s277
      %p289 = scmp.eq.s32.totalorder %s36, 1
      %p290 = por %p288, %p289
      %p292 = scmp.ne.s32.totalorder %s277, %s291
      %p293 = scmp.eq.s32.totalorder %s36, 0
      %p294 = por %p292, %p293
      %s296 = sadd.s32 %s295, 1
      %p299 = scmp.eq.s32.totalorder %s30, 1
      %p300 = scmp.ne.s32.totalorder %s295, %s297
      %p301 = scmp.eq.s32.totalorder %s30, 0
      %p302 = por %p300, %p301
      %p303 = scmp.ne.s32.totalorder %s295, %s297
      %p304 = scmp.eq.s32.totalorder %s35, 1
      %p305 = por %p303, %p304
      %p306 = scmp.ne.s32.totalorder %s297, %s298
      %p307 = scmp.eq.s32.totalorder %s35, 0
      %p308 = por %p306, %p307
      %p309 = scmp.ne.s32.totalorder %s297, %s298
      %p310 = scmp.eq.s32.totalorder %s36, 1
      %p311 = por %p309, %p310
      %p313 = scmp.ne.s32.totalorder %s298, %s312
      %p314 = scmp.eq.s32.totalorder %s36, 0
      %p315 = por %p313, %p314
      %s317 = sadd.s32 %s316, 1
      %p320 = scmp.eq.s32.totalorder %s30, 1
      %p321 = scmp.ne.s32.totalorder %s316, %s318
      %p322 = scmp.eq.s32.totalorder %s30, 0
      %p323 = por %p321, %p322
      %p324 = scmp.ne.s32.totalorder %s316, %s318
      %p325 = scmp.eq.s32.totalorder %s35, 1
      %p326 = por %p324, %p325
      %p327 = scmp.ne.s32.totalorder %s318, %s319
      %p328 = scmp.eq.s32.totalorder %s35, 0
      %p329 = por %p327, %p328
      %p330 = scmp.ne.s32.totalorder %s318, %s319
      %p331 = scmp.eq.s32.totalorder %s36, 1
      %p332 = por %p330, %p331
      %p334 = scmp.ne.s32.totalorder %s319, %s333
      %p335 = scmp.eq.s32.totalorder %s36, 0
      %p336 = por %p334, %p335
      %s338 = sadd.s32 %s337, 1
      %p341 = scmp.eq.s32.totalorder %s30, 1
      %p342 = scmp.ne.s32.totalorder %s337, %s339
      %p343 = scmp.eq.s32.totalorder %s30, 0
      %p344 = por %p342, %p343
      %p345 = scmp.ne.s32.totalorder %s337, %s339
      %p346 = scmp.eq.s32.totalorder %s35, 1
      %p347 = por %p345, %p346
      %p348 = scmp.ne.s32.totalorder %s339, %s340
      %p349 = scmp.eq.s32.totalorder %s35, 0
      %p350 = por %p348, %p349
      %p351 = scmp.ne.s32.totalorder %s339, %s340
      %p352 = scmp.eq.s32.totalorder %s36, 1
      %p353 = por %p351, %p352
      %p355 = scmp.ne.s32.totalorder %s340, %s354
      %p356 = scmp.eq.s32.totalorder %s36, 0
      %p357 = por %p355, %p356
      %s359 = sadd.s32 %s358, 1
      %p362 = scmp.eq.s32.totalorder %s30, 1
      %p363 = scmp.ne.s32.totalorder %s358, %s360
      %p364 = scmp.eq.s32.totalorder %s30, 0
      %p365 = por %p363, %p364
      %p366 = scmp.ne.s32.totalorder %s358, %s360
      %p367 = scmp.eq.s32.totalorder %s35, 1
      %p368 = por %p366, %p367
      %p369 = scmp.ne.s32.totalorder %s360, %s361
      %p370 = scmp.eq.s32.totalorder %s35, 0
      %p371 = por %p369, %p370
      %p372 = scmp.ne.s32.totalorder %s360, %s361
      %p373 = scmp.eq.s32.totalorder %s36, 1
      %p374 = por %p372, %p373
      %p376 = scmp.ne.s32.totalorder %s361, %s375
      %p377 = scmp.eq.s32.totalorder %s36, 0
      %p378 = por %p376, %p377
      %s380 = sadd.s32 %s379, 1
      %p383 = scmp.eq.s32.totalorder %s30, 1
      %p384 = scmp.ne.s32.totalorder %s379, %s381
      %p385 = scmp.eq.s32.totalorder %s30, 0
      %p386 = por %p384, %p385
      %p387 = scmp.ne.s32.totalorder %s379, %s381
      %p388 = scmp.eq.s32.totalorder %s35, 1
      %p389 = por %p387, %p388
      %p390 = scmp.ne.s32.totalorder %s381, %s382
      %p391 = scmp.eq.s32.totalorder %s35, 0
      %p392 = por %p390, %p391
      %p393 = scmp.ne.s32.totalorder %s381, %s382
      %p394 = scmp.eq.s32.totalorder %s36, 1
      %p395 = por %p393, %p394
      %p397 = scmp.ne.s32.totalorder %s382, %s396
      %p398 = scmp.eq.s32.totalorder %s36, 0
      %p399 = por %p397, %p398
      %s401 = sadd.s32 %s400, 1
      %p404 = scmp.eq.s32.totalorder %s30, 1
      %p405 = scmp.ne.s32.totalorder %s400, %s402
      %p406 = scmp.eq.s32.totalorder %s30, 0
      %p407 = por %p405, %p406
      %p408 = scmp.ne.s32.totalorder %s400, %s402
      %p409 = scmp.eq.s32.totalorder %s35, 1
      %p410 = por %p408, %p409
      %p411 = scmp.ne.s32.totalorder %s402, %s403
      %p412 = scmp.eq.s32.totalorder %s35, 0
      %p413 = por %p411, %p412
      %p414 = scmp.ne.s32.totalorder %s402, %s403
      %p415 = scmp.eq.s32.totalorder %s36, 1
      %p416 = por %p414, %p415
      %p418 = scmp.ne.s32.totalorder %s403, %s417
      %p419 = scmp.eq.s32.totalorder %s36, 0
      %p420 = por %p418, %p419
      %s422 = sadd.s32 %s421, 1
      %p425 = scmp.eq.s32.totalorder %s30, 1
      %p426 = scmp.ne.s32.totalorder %s421, %s423
      %p427 = scmp.eq.s32.totalorder %s30, 0
      %p428 = por %p426, %p427
      %p429 = scmp.ne.s32.totalorder %s421, %s423
      %p430 = scmp.eq.s32.totalorder %s35, 1
      %p431 = por %p429, %p430
      %p432 = scmp.ne.s32.totalorder %s423, %s424
      %p433 = scmp.eq.s32.totalorder %s35, 0
      %p434 = por %p432, %p433
      %p435 = scmp.ne.s32.totalorder %s423, %s424
      %p436 = scmp.eq.s32.totalorder %s36, 1
      %p437 = por %p435, %p436
      %p439 = scmp.ne.s32.totalorder %s424, %s438
      %p440 = scmp.eq.s32.totalorder %s36, 0
      %p441 = por %p439, %p440
      %s443 = sadd.s32 %s442, 1
      %p446 = scmp.eq.s32.totalorder %s30, 1
      %p447 = scmp.ne.s32.totalorder %s442, %s444
      %p448 = scmp.eq.s32.totalorder %s30, 0
      %p449 = por %p447, %p448
      %p450 = scmp.ne.s32.totalorder %s442, %s444
      %p451 = scmp.eq.s32.totalorder %s35, 1
      %p452 = por %p450, %p451
      %p453 = scmp.ne.s32.totalorder %s444, %s445
      %p454 = scmp.eq.s32.totalorder %s35, 0
      %p455 = por %p453, %p454
      %p456 = scmp.ne.s32.totalorder %s444, %s445
      %p457 = scmp.eq.s32.totalorder %s36, 1
      %p458 = por %p456, %p457
      %p460 = scmp.ne.s32.totalorder %s445, %s459
      %p461 = scmp.eq.s32.totalorder %s36, 0
      %p462 = por %p460, %p461
      %s464 = sadd.s32 %s463, 1
      %p467 = scmp.eq.s32.totalorder %s30, 1
      %p468 = scmp.ne.s32.totalorder %s463, %s465
      %p469 = scmp.eq.s32.totalorder %s30, 0
      %p470 = por %p468, %p469
      %p471 = scmp.ne.s32.totalorder %s463, %s465
      %p472 = scmp.eq.s32.totalorder %s35, 1
      %p473 = por %p471, %p472
      %p474 = scmp.ne.s32.totalorder %s465, %s466
      %p475 = scmp.eq.s32.totalorder %s35, 0
      %p476 = por %p474, %p475
      %p477 = scmp.ne.s32.totalorder %s465, %s466
      %p478 = scmp.eq.s32.totalorder %s36, 1
      %p479 = por %p477, %p478
      %p481 = scmp.ne.s32.totalorder %s466, %s480
      %p482 = scmp.eq.s32.totalorder %s36, 0
      %p483 = por %p481, %p482
      %s484 = ssub.s32 %s30, %s37
      %p485 = scmp.eq.s32.totalorder %s484, 0
      %s487 = sadd.s32 %s486, 1
      %s488 = scalar_select %p485, %s486, %s487
      %p491 = pneg %p485
      %p492 = scmp.eq.s32.totalorder %s30, 1
      %p493 = por %p491, %p492
      %p494 = scmp.ne.s32.totalorder %s486, %s489
      %p495 = scmp.eq.s32.totalorder %s30, 0
      %p496 = por %p494, %p495
      %p497 = scmp.ne.s32.totalorder %s486, %s489
      %p498 = scmp.eq.s32.totalorder %s35, 1
      %p499 = por %p497, %p498
      %p500 = scmp.ne.s32.totalorder %s489, %s490
      %p501 = scmp.eq.s32.totalorder %s35, 0
      %p502 = por %p500, %p501
      %p503 = scmp.ne.s32.totalorder %s489, %s490
      %p504 = scmp.eq.s32.totalorder %s36, 1
      %p505 = por %p503, %p504
      %p507 = scmp.ne.s32.totalorder %s490, %s506
      %p508 = scmp.eq.s32.totalorder %s36, 0
      %p509 = por %p507, %p508
      %p510 = scmp.le.s32.totalorder 1, %s30
      %p511 = scmp.lt.s32.totalorder %s30, 3
      %p512 = pnand %p510, %p511
      %p513 = pneg %p512
      // Predicated region
      $region9: #{vit_forward.1} parent=5 // pred_check
        _
      $region10: #{vit_forward.1} parent=5 // pred_check_branch
        %515 = sbr.rel (%p512) target = $region12
      $region11: #{vit_forward.1} parent=5 // pred_region
        %s516 = ssub.s32 %s30, 1
        // Predicated region
        $region13: #{vit_forward.1} parent=11 // pred_check
          %p517 = pneg %p77
        $region14: #{vit_forward.1} parent=11 // pred_check_branch
          %519 = sbr.rel (%p517) target = $region16
        $region15: #{vit_forward.1} parent=11 // pred_region
          _
        $region16: #{vit_forward.1} parent=11 // pred_fallthru
          _
        // Predicated region
        $region17: #{vit_forward.1} parent=11 // pred_check
          %p520 = pneg %p98
        $region18: #{vit_forward.1} parent=11 // pred_check_branch
          %522 = sbr.rel (%p520) target = $region20
        $region19: #{vit_forward.1} parent=11 // pred_region
          _
        $region20: #{vit_forward.1} parent=11 // pred_fallthru
          _
        // Predicated region
        $region21: #{vit_forward.1} parent=11 // pred_check
          %p523 = pneg %p119
        $region22: #{vit_forward.1} parent=11 // pred_check_branch
          %525 = sbr.rel (%p523) target = $region24
        $region23: #{vit_forward.1} parent=11 // pred_region
          _
        $region24: #{vit_forward.1} parent=11 // pred_fallthru
          _
        // Predicated region
        $region25: #{vit_forward.1} parent=11 // pred_check
          %p526 = pneg %p140
        $region26: #{vit_forward.1} parent=11 // pred_check_branch
          %528 = sbr.rel (%p526) target = $region28
        $region27: #{vit_forward.1} parent=11 // pred_region
          _
        $region28: #{vit_forward.1} parent=11 // pred_fallthru
          _
        // Predicated region
        $region29: #{vit_forward.1} parent=11 // pred_check
          %p529 = pneg %p161
        $region30: #{vit_forward.1} parent=11 // pred_check_branch
          %531 = sbr.rel (%p529) target = $region32
        $region31: #{vit_forward.1} parent=11 // pred_region
          _
        $region32: #{vit_forward.1} parent=11 // pred_fallthru
          _
        // Predicated region
        $region33: #{vit_forward.1} parent=11 // pred_check
          %p532 = pneg %p182
        $region34: #{vit_forward.1} parent=11 // pred_check_branch
          %534 = sbr.rel (%p532) target = $region36
        $region35: #{vit_forward.1} parent=11 // pred_region
          _
        $region36: #{vit_forward.1} parent=11 // pred_fallthru
          _
        // Predicated region
        $region37: #{vit_forward.1} parent=11 // pred_check
          %p535 = pneg %p203
        $region38: #{vit_forward.1} parent=11 // pred_check_branch
          %537 = sbr.rel (%p535) target = $region40
        $region39: #{vit_forward.1} parent=11 // pred_region
          _
        $region40: #{vit_forward.1} parent=11 // pred_fallthru
          _
        // Predicated region
        $region41: #{vit_forward.1} parent=11 // pred_check
          %p538 = pneg %p224
        $region42: #{vit_forward.1} parent=11 // pred_check_branch
          %540 = sbr.rel (%p538) target = $region44
        $region43: #{vit_forward.1} parent=11 // pred_region
          _
        $region44: #{vit_forward.1} parent=11 // pred_fallthru
          _
        // Predicated region
        $region45: #{vit_forward.1} parent=11 // pred_check
          %p541 = pneg %p245
        $region46: #{vit_forward.1} parent=11 // pred_check_branch
          %543 = sbr.rel (%p541) target = $region48
        $region47: #{vit_forward.1} parent=11 // pred_region
          _
        $region48: #{vit_forward.1} parent=11 // pred_fallthru
          _
        // Predicated region
        $region49: #{vit_forward.1} parent=11 // pred_check
          %p544 = pneg %p266
        $region50: #{vit_forward.1} parent=11 // pred_check_branch
          %546 = sbr.rel (%p544) target = $region52
        $region51: #{vit_forward.1} parent=11 // pred_region
          _
        $region52: #{vit_forward.1} parent=11 // pred_fallthru
          _
        // Predicated region
        $region53: #{vit_forward.1} parent=11 // pred_check
          %p547 = pneg %p287
        $region54: #{vit_forward.1} parent=11 // pred_check_branch
          %549 = sbr.rel (%p547) target = $region56
        $region55: #{vit_forward.1} parent=11 // pred_region
          _
        $region56: #{vit_forward.1} parent=11 // pred_fallthru
          _
        // Predicated region
        $region57: #{vit_forward.1} parent=11 // pred_check
          %p550 = pneg %p308
        $region58: #{vit_forward.1} parent=11 // pred_check_branch
          %552 = sbr.rel (%p550) target = $region60
        $region59: #{vit_forward.1} parent=11 // pred_region
          _
        $region60: #{vit_forward.1} parent=11 // pred_fallthru
          _
        // Predicated region
        $region61: #{vit_forward.1} parent=11 // pred_check
          %p553 = pneg %p329
        $region62: #{vit_forward.1} parent=11 // pred_check_branch
          %555 = sbr.rel (%p553) target = $region64
        $region63: #{vit_forward.1} parent=11 // pred_region
          _
        $region64: #{vit_forward.1} parent=11 // pred_fallthru
          _
        // Predicated region
        $region65: #{vit_forward.1} parent=11 // pred_check
          %p556 = pneg %p350
        $region66: #{vit_forward.1} parent=11 // pred_check_branch
          %558 = sbr.rel (%p556) target = $region68
        $region67: #{vit_forward.1} parent=11 // pred_region
          _
        $region68: #{vit_forward.1} parent=11 // pred_fallthru
          _
        // Predicated region
        $region69: #{vit_forward.1} parent=11 // pred_check
          %p559 = pneg %p371
        $region70: #{vit_forward.1} parent=11 // pred_check_branch
          %561 = sbr.rel (%p559) target = $region72
        $region71: #{vit_forward.1} parent=11 // pred_region
          _
        $region72: #{vit_forward.1} parent=11 // pred_fallthru
          _
        // Predicated region
        $region73: #{vit_forward.1} parent=11 // pred_check
          %p562 = pneg %p392
        $region74: #{vit_forward.1} parent=11 // pred_check_branch
          %564 = sbr.rel (%p562) target = $region76
        $region75: #{vit_forward.1} parent=11 // pred_region
          _
        $region76: #{vit_forward.1} parent=11 // pred_fallthru
          _
        // Predicated region
        $region77: #{vit_forward.1} parent=11 // pred_check
          %p565 = pneg %p413
        $region78: #{vit_forward.1} parent=11 // pred_check_branch
          %567 = sbr.rel (%p565) target = $region80
        $region79: #{vit_forward.1} parent=11 // pred_region
          _
        $region80: #{vit_forward.1} parent=11 // pred_fallthru
          _
        // Predicated region
        $region81: #{vit_forward.1} parent=11 // pred_check
          %p568 = pneg %p434
        $region82: #{vit_forward.1} parent=11 // pred_check_branch
          %570 = sbr.rel (%p568) target = $region84
        $region83: #{vit_forward.1} parent=11 // pred_region
          _
        $region84: #{vit_forward.1} parent=11 // pred_fallthru
          _
        // Predicated region
        $region85: #{vit_forward.1} parent=11 // pred_check
          %p571 = pneg %p455
        $region86: #{vit_forward.1} parent=11 // pred_check_branch
          %573 = sbr.rel (%p571) target = $region88
        $region87: #{vit_forward.1} parent=11 // pred_region
          _
        $region88: #{vit_forward.1} parent=11 // pred_fallthru
          _
        // Predicated region
        $region89: #{vit_forward.1} parent=11 // pred_check
          %p574 = pneg %p476
        $region90: #{vit_forward.1} parent=11 // pred_check_branch
          %576 = sbr.rel (%p574) target = $region92
        $region91: #{vit_forward.1} parent=11 // pred_region
          _
        $region92: #{vit_forward.1} parent=11 // pred_fallthru
          _
      $region12: #{vit_forward.1} parent=5 // pred_fallthru
        _
      %p577 = scmp.lt.s32.totalorder %s30, 2
      // Predicated region
      $region93: #{vit_forward.1} parent=5 // pred_check
        %p578 = pneg %p577
      $region94: #{vit_forward.1} parent=5 // pred_check_branch
        %580 = sbr.rel (%p578) target = $region96
      $region95: #{vit_forward.1} parent=5 // pred_region
        // Predicated region
        $region97: #{vit_forward.1} parent=95 // pred_check
          %p581 = pneg %p50
        $region98: #{vit_forward.1} parent=95 // pred_check_branch
          %583 = sbr.rel (%p581) target = $region100
        $region99: #{vit_forward.1} parent=95 // pred_region
          %p584 = scmp.lt.s32.totalorder %s30, 1
          %s585 = scalar_select %p584, %s30, 1
          %s586 = smul.addr %s585, 6
          %s587 = smul.addr %s586, 4
          %s588 = scalar_lea.vmem %s0, %s587
        $region100: #{vit_forward.1} parent=95 // pred_fallthru
          _
      $region96: #{vit_forward.1} parent=5 // pred_fallthru
        _
      %p589 = scmp.le.s32.totalorder 1, %s30
      %p590 = scmp.lt.s32.totalorder %s30, 3
      %p591 = pnand %p589, %p590
      %p592 = pneg %p591
      // Predicated region
      $region101: #{vit_forward.1} parent=5 // pred_check
        _
      $region102: #{vit_forward.1} parent=5 // pred_check_branch
        %594 = sbr.rel (%p591) target = $region104
      $region103: #{vit_forward.1} parent=5 // pred_region
        %s595 = ssub.s32 %s30, 1
        %p596 = scmp.lt.s32.totalorder %s35, 1
        %s597 = scalar_select %p596, %s35, 1
        %s598 = smul.addr %s597, 6
        %s599 = smul.addr %s598, 4
        %s600 = scalar_lea.vmem %s0, %s599
        %p601 = pneg %p56
        %p602 = pneg %p53
        %p603 = pneg %p77
        %p604 = pneg %p74
        %p605 = pneg %p98
        %p606 = pneg %p95
        %p607 = pneg %p119
        %p608 = pneg %p116
        %p609 = pneg %p140
        %p610 = pneg %p137
        %p611 = pneg %p161
        %p612 = pneg %p158
        %p613 = pneg %p182
        %p614 = pneg %p179
        %p615 = pneg %p203
        %p616 = pneg %p200
        %p617 = pneg %p224
        %p618 = pneg %p221
        %p619 = pneg %p245
        %p620 = pneg %p242
        %p621 = pneg %p266
        %p622 = pneg %p263
        %p623 = pneg %p287
        %p624 = pneg %p284
        %p625 = pneg %p308
        %p626 = pneg %p305
        %p627 = pneg %p329
        %p628 = pneg %p326
        %p629 = pneg %p350
        %p630 = pneg %p347
        %p631 = pneg %p371
        %p632 = pneg %p368
        %p633 = pneg %p392
        %p634 = pneg %p389
        %p635 = pneg %p413
        %p636 = pneg %p410
        %p637 = pneg %p434
        %p638 = pneg %p431
        %p639 = pneg %p455
        %p640 = pneg %p452
        %p641 = pneg %p476
        %p642 = pneg %p473
        %p643 = pneg %p502
        %p644 = pneg %p499
        %s645 = sand.u32 %s489, 1
        %s646 = scalar_lea.sflag [#allocation3], %s645
        %s647 = sand.u32 %s489, 1
        %s648 = scalar_lea.vmem [#allocation2], %s647
        %p649 = scmp.lt.s32.totalorder %s35, 1
        %s650 = scalar_select %p649, %s35, 1
        %s651 = smul.addr %s650, 6
        %s652 = smul.addr %s651, 4
        %s653 = scalar_lea.vmem %s0, %s652
        %v654 = vld [vmem:[%s653] sm:$0xff]
        %v655 = vld [vmem:[%s653 + $0x8] sm:$0xff]
        %v656 = vld [vmem:[%s653 + $0x10] sm:$0xff]
        %v657 = vld [vmem:[%s1] sm:$0xff]
        %v658 = vld [vmem:[%s1 + $0x8] sm:$0xff]
        %v659 = vld [vmem:[%s1 + $0x10] sm:$0xff]
        %v660 = vld [vmem:[%s1 + $0x18] sm:$0xff]
        %v661 = vld [vmem:[%s1 + $0x20] sm:$0xff]
        %v662 = vld [vmem:[%s1 + $0x28] sm:$0xff]
        %v663 = vld [vmem:[%s1 + $0x30] sm:$0xff]
        %v664 = vld [vmem:[%s1 + $0x38] sm:$0xff]
        %v665 = vld [vmem:[%s1 + $0x40] sm:$0xff]
        %v666 = vld [vmem:[%s1 + $0x48] sm:$0xff]
        %v667 = vld [vmem:[%s1 + $0x50] sm:$0xff]
        %v668 = vld [vmem:[%s1 + $0x58] sm:$0xff]
        %v669 = vld [vmem:[%s1 + $0x60] sm:$0xff]
        %v670 = vld [vmem:[%s1 + $0x68] sm:$0xff]
        %v671 = vld [vmem:[%s1 + $0x70] sm:$0xff]
        %v672 = vld [vmem:[%s1 + $0x78] sm:$0xff]
        %v673 = vld [vmem:[%s1 + $0x80] sm:$0xff]
        %v674 = vld [vmem:[%s1 + $0x88] sm:$0xff]
        %v675 = vld [vmem:[%s1 + $0x90] sm:$0xff]
        %v676 = vld [vmem:[%s1 + $0x98] sm:$0xff]
        %v677 = vld [vmem:[%s1 + $0xa0] sm:$0xff]
        %v678 = vld [vmem:[%s1 + $0xa8] sm:$0xff]
        %v679 = vld [vmem:[%s1 + $0xb0] sm:$0xff]
        %v680 = vld [vmem:[%s1 + $0xb8] sm:$0xff]
        %v681 = vld [vmem:[%s1 + $0xc0] sm:$0xff]
        %v682 = vld [vmem:[%s1 + $0xc8] sm:$0xff]
        %v683 = vld [vmem:[%s1 + $0xd0] sm:$0xff]
        %v684 = vld [vmem:[%s1 + $0xd8] sm:$0xff]
        %v685 = vld [vmem:[%s1 + $0xe0] sm:$0xff]
        %v686 = vld [vmem:[%s1 + $0xe8] sm:$0xff]
        %v687 = vld [vmem:[%s1 + $0xf0] sm:$0xff]
        %v688 = vld [vmem:[%s1 + $0xf8] sm:$0xff]
        %v689 = vld [vmem:[%s1 + $0x100] sm:$0xff]
        %v690 = vld [vmem:[%s1 + $0x108] sm:$0xff]
        %v691 = vld [vmem:[%s1 + $0x110] sm:$0xff]
        %v692 = vld [vmem:[%s1 + $0x118] sm:$0xff]
        %v693 = vld [vmem:[%s1 + $0x120] sm:$0xff]
        %v694 = vld [vmem:[%s1 + $0x128] sm:$0xff]
        %v695 = vld [vmem:[%s1 + $0x130] sm:$0xff]
        %v696 = vld [vmem:[%s1 + $0x138] sm:$0xff]
        %v697 = vld [vmem:[%s1 + $0x140] sm:$0xff]
        %v698 = vld [vmem:[%s1 + $0x148] sm:$0xff]
        %v699 = vld [vmem:[%s1 + $0x150] sm:$0xff]
        %v700 = vld [vmem:[%s1 + $0x158] sm:$0xff]
        %v701 = vld [vmem:[%s1 + $0x160] sm:$0xff]
        %v702 = vld [vmem:[%s1 + $0x168] sm:$0xff]
        %v703 = vld [vmem:[%s1 + $0x170] sm:$0xff]
        %v704 = vld [vmem:[%s1 + $0x178] sm:$0xff]
        %v705 = vld [vmem:[%s1 + $0x180] sm:$0xff]
        %v706 = vld [vmem:[%s1 + $0x188] sm:$0xff]
        %v707 = vld [vmem:[%s1 + $0x190] sm:$0xff]
        %v708 = vld [vmem:[%s1 + $0x198] sm:$0xff]
        %v709 = vld [vmem:[%s1 + $0x1a0] sm:$0xff]
        %v710 = vld [vmem:[%s1 + $0x1a8] sm:$0xff]
        %v711 = vld [vmem:[%s1 + $0x1b0] sm:$0xff]
        %v712 = vld [vmem:[%s1 + $0x1b8] sm:$0xff]
        %v713 = vld [vmem:[%s1 + $0x1c0] sm:$0xff]
        %v714 = vld [vmem:[%s1 + $0x1c8] sm:$0xff]
        %v715 = vld [vmem:[%s1 + $0x1d0] sm:$0xff]
        %v716 = vld [vmem:[%s1 + $0x1d8] sm:$0xff]
        %v717 = vld [vmem:[%s1 + $0x1e0] sm:$0xff]
        %v718 = vld [vmem:[%s1 + $0x1e8] sm:$0xff]
        %v719 = vld [vmem:[%s1 + $0x1f0] sm:$0xff]
        %v720 = vld [vmem:[%s1 + $0x1f8] sm:$0xff]
        %v721 = vld [vmem:[%s1 + $0x200] sm:$0xff]
        %v722 = vld [vmem:[%s1 + $0x208] sm:$0xff]
        %v723 = vld [vmem:[%s1 + $0x210] sm:$0xff]
        %v724 = vld [vmem:[%s1 + $0x218] sm:$0xff]
        %v725 = vld [vmem:[%s1 + $0x220] sm:$0xff]
        %v726 = vld [vmem:[%s1 + $0x228] sm:$0xff]
        %v727 = vld [vmem:[%s1 + $0x230] sm:$0xff]
        %v728 = vld [vmem:[%s1 + $0x238] sm:$0xff]
        %v729 = vld [vmem:[%s1 + $0x240] sm:$0xff]
        %v730 = vld [vmem:[%s1 + $0x248] sm:$0xff]
        %v731 = vld [vmem:[%s1 + $0x250] sm:$0xff]
        %v732 = vld [vmem:[%s1 + $0x258] sm:$0xff]
        %v733 = vld [vmem:[%s1 + $0x260] sm:$0xff]
        %v734 = vld [vmem:[%s1 + $0x268] sm:$0xff]
        %v735 = vld [vmem:[%s1 + $0x270] sm:$0xff]
        %v736 = vld [vmem:[%s1 + $0x278] sm:$0xff]
        %v737 = vld [vmem:[%s1 + $0x280] sm:$0xff]
        %v738 = vld [vmem:[%s1 + $0x288] sm:$0xff]
        %v739 = vld [vmem:[%s1 + $0x290] sm:$0xff]
        %v740 = vld [vmem:[%s1 + $0x298] sm:$0xff]
        %v741 = vld [vmem:[%s1 + $0x2a0] sm:$0xff]
        %v742 = vld [vmem:[%s1 + $0x2a8] sm:$0xff]
        %v743 = vld [vmem:[%s1 + $0x2b0] sm:$0xff]
        %v744 = vld [vmem:[%s1 + $0x2b8] sm:$0xff]
        %v745 = vld [vmem:[%s1 + $0x2c0] sm:$0xff]
        %v746 = vld [vmem:[%s1 + $0x2c8] sm:$0xff]
        %v747 = vld [vmem:[%s1 + $0x2d0] sm:$0xff]
        %v748 = vld [vmem:[%s1 + $0x2d8] sm:$0xff]
        %v749 = vld [vmem:[%s1 + $0x2e0] sm:$0xff]
        %v750 = vld [vmem:[%s1 + $0x2e8] sm:$0xff]
        %v751 = vld [vmem:[%s1 + $0x2f0] sm:$0xff]
        %v752 = vld [vmem:[%s1 + $0x2f8] sm:$0xff]
        %v753 = vld [vmem:[%s2] sm:$0x1]
        %v755 = vperm.slane %v753, 0
        %760 = vst [vmem:[#allocation1] ss:$2 sm:$0xff] %v654
        %s761 = scalar_lea.vmem [#allocation1], 16
        %762 = vst [vmem:[%s761] ss:$2 sm:$0xff] %v655
        %s763 = scalar_lea.vmem [#allocation1], 32
        %764 = vst [vmem:[%s763] ss:$2 sm:$0xff] %v656
        %v765 = vld.sshfl [vmem:[#allocation1] sm:$0xff pattern:$0x75316420]
        %v766 = vld.sshfl [vmem:[#allocation1 + $0x8] sm:$0xff pattern:$0x75316420]
        %v767 = vld.sshfl [vmem:[#allocation1 + $0x10] sm:$0xff pattern:$0x75316420]
        %v768 = vld.sshfl [vmem:[#allocation1 + $0x18] sm:$0xff pattern:$0x75316420]
        %v769 = vld.sshfl [vmem:[#allocation1 + $0x20] sm:$0xff pattern:$0x75316420]
        %v770 = vld.sshfl [vmem:[#allocation1 + $0x28] sm:$0xff pattern:$0x75316420]
        %777 = vmatpush.msra.mxu0 %v672
        %778 = vmatpush.msra.mxu0 %v671
        %779 = vmatpush.msra.mxu0 %v670
        %780 = vmatpush.msra.mxu0 %v669
        %781 = vmatpush.msra.mxu0 %v668
        %782 = vmatpush.msra.mxu0 %v667
        %783 = vmatpush.msra.mxu0 %v666
        %784 = vmatpush.msra.mxu0 %v665
        %785 = vmatpush.msra.mxu0 %v664
        %786 = vmatpush.msra.mxu0 %v663
        %787 = vmatpush.msra.mxu0 %v662
        %788 = vmatpush.msra.mxu0 %v661
        %789 = vmatpush.msra.mxu0 %v660
        %790 = vmatpush.msra.mxu0 %v659
        %791 = vmatpush.msra.mxu0 %v658
        %792 = vmatpush.msra.mxu0 %v657
        %793 = vmatmul.f32.gmra.mxu0 %v765
        %v794 = vpop.f32.mrf.mxu0
        %v795 = vadd.f32 %v755, %v794
        %796 = vdwg.mxu0
        %797 = vmatpush.msra.mxu0 %v688
        %798 = vmatpush.msra.mxu0 %v687
        %799 = vmatpush.msra.mxu0 %v686
        %800 = vmatpush.msra.mxu0 %v685
        %801 = vmatpush.msra.mxu0 %v684
        %802 = vmatpush.msra.mxu0 %v683
        %803 = vmatpush.msra.mxu0 %v682
        %804 = vmatpush.msra.mxu0 %v681
        %805 = vmatpush.msra.mxu0 %v680
        %806 = vmatpush.msra.mxu0 %v679
        %807 = vmatpush.msra.mxu0 %v678
        %808 = vmatpush.msra.mxu0 %v677
        %809 = vmatpush.msra.mxu0 %v676
        %810 = vmatpush.msra.mxu0 %v675
        %811 = vmatpush.msra.mxu0 %v674
        %812 = vmatpush.msra.mxu0 %v673
        %813 = vmatmul.f32.gmra.mxu0 %v766
        %v814 = vpop.f32.mrf.mxu0
        %v815 = vadd.f32 %v795, %v814
        %816 = vdwg.mxu0
        %817 = vmatpush.msra.mxu0 %v704
        %818 = vmatpush.msra.mxu0 %v703
        %819 = vmatpush.msra.mxu0 %v702
        %820 = vmatpush.msra.mxu0 %v701
        %821 = vmatpush.msra.mxu0 %v700
        %822 = vmatpush.msra.mxu0 %v699
        %823 = vmatpush.msra.mxu0 %v698
        %824 = vmatpush.msra.mxu0 %v697
        %825 = vmatpush.msra.mxu0 %v696
        %826 = vmatpush.msra.mxu0 %v695
        %827 = vmatpush.msra.mxu0 %v694
        %828 = vmatpush.msra.mxu0 %v693
        %829 = vmatpush.msra.mxu0 %v692
        %830 = vmatpush.msra.mxu0 %v691
        %831 = vmatpush.msra.mxu0 %v690
        %832 = vmatpush.msra.mxu0 %v689
        %833 = vmatmul.f32.gmra.mxu0 %v767
        %v834 = vpop.f32.mrf.mxu0
        %v835 = vadd.f32 %v815, %v834
        %836 = vdwg.mxu0
        %837 = vmatpush.msra.mxu0 %v720
        %838 = vmatpush.msra.mxu0 %v719
        %839 = vmatpush.msra.mxu0 %v718
        %840 = vmatpush.msra.mxu0 %v717
        %841 = vmatpush.msra.mxu0 %v716
        %842 = vmatpush.msra.mxu0 %v715
        %843 = vmatpush.msra.mxu0 %v714
        %844 = vmatpush.msra.mxu0 %v713
        %845 = vmatpush.msra.mxu0 %v712
        %846 = vmatpush.msra.mxu0 %v711
        %847 = vmatpush.msra.mxu0 %v710
        %848 = vmatpush.msra.mxu0 %v709
        %849 = vmatpush.msra.mxu0 %v708
        %850 = vmatpush.msra.mxu0 %v707
        %851 = vmatpush.msra.mxu0 %v706
        %852 = vmatpush.msra.mxu0 %v705
        %853 = vmatmul.f32.gmra.mxu0 %v768
        %v854 = vpop.f32.mrf.mxu0
        %v855 = vadd.f32 %v835, %v854
        %856 = vdwg.mxu0
        %857 = vmatpush.msra.mxu0 %v736
        %858 = vmatpush.msra.mxu0 %v735
        %859 = vmatpush.msra.mxu0 %v734
        %860 = vmatpush.msra.mxu0 %v733
        %861 = vmatpush.msra.mxu0 %v732
        %862 = vmatpush.msra.mxu0 %v731
        %863 = vmatpush.msra.mxu0 %v730
        %864 = vmatpush.msra.mxu0 %v729
        %865 = vmatpush.msra.mxu0 %v728
        %866 = vmatpush.msra.mxu0 %v727
        %867 = vmatpush.msra.mxu0 %v726
        %868 = vmatpush.msra.mxu0 %v725
        %869 = vmatpush.msra.mxu0 %v724
        %870 = vmatpush.msra.mxu0 %v723
        %871 = vmatpush.msra.mxu0 %v722
        %872 = vmatpush.msra.mxu0 %v721
        %873 = vmatmul.f32.gmra.mxu0 %v769
        %v874 = vpop.f32.mrf.mxu0
        %v875 = vadd.f32 %v855, %v874
        %876 = vdwg.mxu0
        %877 = vmatpush.msra.mxu0 %v752
        %878 = vmatpush.msra.mxu0 %v751
        %879 = vmatpush.msra.mxu0 %v750
        %880 = vmatpush.msra.mxu0 %v749
        %881 = vmatpush.msra.mxu0 %v748
        %882 = vmatpush.msra.mxu0 %v747
        %883 = vmatpush.msra.mxu0 %v746
        %884 = vmatpush.msra.mxu0 %v745
        %885 = vmatpush.msra.mxu0 %v744
        %886 = vmatpush.msra.mxu0 %v743
        %887 = vmatpush.msra.mxu0 %v742
        %888 = vmatpush.msra.mxu0 %v741
        %889 = vmatpush.msra.mxu0 %v740
        %890 = vmatpush.msra.mxu0 %v739
        %891 = vmatpush.msra.mxu0 %v738
        %892 = vmatpush.msra.mxu0 %v737
        %893 = vmatmul.f32.gmra.mxu0 %v770
        %v894 = vpop.f32.mrf.mxu0
        %v895 = vadd.f32 %v875, %v894
        %896 = vdwg.mxu0
        %v897 = vld [vmem:[%s4 + $0x1] sm:$0xf]
        %v898 = vadd.f32 %v895, %v897
        %v899 = vld [vmem:[%s3] sm:$0x1]
        %v900 = vld [vmem:[%s4] sm:$0x1]
        %v901 = vadd.f32 %v899, %v900
        %v903 = vrot.slane %v898, 7
        %vm905 = vcmask 1040384
        %v906 = vsel %vm905, %v901, %v903
        %v907 = vld [vmem:[%s5] sm:$0x1]
        %v908 = vld [vmem:[%s6] sm:$0x1]
        %vm909 = vcmask 258048
        %v910 = vsel %vm909, %v906, 0.0
        %911 = vadd.xlane.f32.xlu0 %v910
        %v912 = vpop.xlane.xlu0 %911
        %v913 = vrcp.pop 32.0
        %v914 = vmul.f32 32.0, %v913
        %v915 = vsub.f32 1.0, %v914
        %v916 = vmul.f32 %v913, %v915
        %v917 = vadd.f32 %v913, %v916
        %vm918 = vweird.f32 %v913
        %v919 = vsel %vm918, %v913, %v917
        %v920 = vmul.f32 %v912, %v919
        %v921 = vsub.f32 %v906, %v920
        %v922 = vmul.f32 %v921, %v921
        %v923 = vsel %vm909, %v922, 0.0
        %924 = vadd.xlane.f32.xlu0 %v923
        %v925 = vpop.xlane.xlu0 %924
        %v926 = vmul.f32 %v925, %v919
        %v927 = vadd.f32 %v926, 1e-06
        %v928 = vrsqrt.pop %v927
        %v929 = vmul.f32 %v928, %v927
        %v930 = vmul.f32 %v929, %v928
        %v931 = vmul.f32 0.5, %v930
        %v932 = vsub.f32 1.5, %v931
        %v933 = vmul.f32 %v928, %v932
        %vm934 = vweird.f32 %v927
        %vm935 = vweird.f32 %v928
        %vm936 = vmor %vm934, %vm935
        %v937 = vsel %vm936, %v928, %v933
        %v938 = vmul.f32 %v921, %v937
        %v940 = vperm.slane %v907, 0
        %v942 = vmul.f32 %v938, %v940
        %v944 = vperm.slane %v908, 0
        %v946 = vadd.f32 %v942, %v944
        %v947 = vld [vmem:[%s7] sm:$0xff]
        %v948 = vld [vmem:[%s7 + $0x8] sm:$0xff]
        %v949 = vld [vmem:[%s7 + $0x10] sm:$0xff]
        %v950 = vld [vmem:[%s7 + $0x18] sm:$0xff]
        %v951 = vld [vmem:[%s8] sm:$0x1]
        %v953 = vperm.slane %v951, 0
        %vm955 = vcmask 261120
        %v957 = vsel %vm955, %v946, 0
        %959 = vmatpush.msra.mxu0 0.0
        %960 = vmatpush.msra.mxu0 0.0
        %961 = vmatpush.msra.mxu0 0.0
        %962 = vmatpush.msra.mxu0 0.0
        %963 = vmatpush.msra.mxu0 0.0
        %964 = vmatpush.msra.mxu0 0.0
        %965 = vmatpush.msra.mxu0 0.0
        %966 = vmatpush.msra.mxu0 0.0
        %967 = vmatpush.msra.mxu0 0.0
        %968 = vmatpush.msra.mxu0 0.0
        %969 = vmatpush.msra.mxu0 0.0
        %970 = vmatpush.msra.mxu0 0.0
        %971 = vmatpush.msra.mxu0 %v950
        %972 = vmatpush.msra.mxu0 %v949
        %973 = vmatpush.msra.mxu0 %v948
        %974 = vmatpush.msra.mxu0 %v947
        %975 = vmatmul.f32.gmra.mxu0 %v957
        %v976 = vpop.f32.mrf.mxu0
        %v977 = vadd.f32 %v953, %v976
        %978 = vdwg.mxu0
        %v979 = vmul.f32 %v977, 0.35355338
        %981 = vrot.lane.b32.xlu0 %v977, 96
        %v982 = vpop.permute.xlu0 %981
        %vm983 = vcmask 64512
        %v985 = vsel %vm983, %v979, 0
        %v987 = vsel %vm983, %v982, 0
        %989 = vmatpush.xpose.msra.mxu0 0.0
        %990 = vmatpush.xpose.msra.mxu0 0.0
        %991 = vmatpush.xpose.msra.mxu0 0.0
        %992 = vmatpush.xpose.msra.mxu0 0.0
        %993 = vmatpush.xpose.msra.mxu0 0.0
        %994 = vmatpush.xpose.msra.mxu0 0.0
        %995 = vmatpush.xpose.msra.mxu0 0.0
        %996 = vmatpush.xpose.msra.mxu0 0.0
        %997 = vmatpush.xpose.msra.mxu0 0.0
        %998 = vmatpush.xpose.msra.mxu0 0.0
        %999 = vmatpush.xpose.msra.mxu0 0.0
        %1000 = vmatpush.xpose.msra.mxu0 0.0
        %1001 = vmatpush.xpose.msra.mxu0 0.0
        %1002 = vmatpush.xpose.msra.mxu0 0.0
        %1003 = vmatpush.xpose.msra.mxu0 0.0
        %1004 = vmatpush.xpose.msra.mxu0 %v987
        %1005 = vmatmul.f32.gmra.mxu0 %v985
        %v1006 = vpop.f32.mrf.mxu0
        %v1007 = vadd.f32 0.0, %v1006
        %1008 = vdwg.mxu0
        %vm1009 = vcmask 36864
        %v1010 = vsel %vm1009, %v1007, -inf
        %1011 = vmax.xlane.f32.xlu0 %v1010
        %v1012 = vpop.xlane.xlu0 %1011
        %v1013 = vsub.f32 %v1007, %v1012
        %v1014 = vmul.f32 %v1013, 1.442695
        %v1015 = vpow.pop %v1014
        %v1016 = vsel %vm1009, %v1015, 0.0
        %1017 = vadd.xlane.f32.xlu0 %v1016
        %v1018 = vpop.xlane.xlu0 %1017
        %v1019 = vrcp.pop %v1018
        %v1020 = vmul.f32 %v1018, %v1019
        %v1021 = vsub.f32 1.0, %v1020
        %v1022 = vmul.f32 %v1019, %v1021
        %v1023 = vadd.f32 %v1019, %v1022
        %vm1024 = vweird.f32 %v1018
        %vm1025 = vweird.f32 %v1019
        %vm1026 = vmor %vm1024, %vm1025
        %v1027 = vsel %vm1026, %v1019, %v1023
        %v1028 = vand.u32 2147483647, %v1018
        %vm1029 = vcmp.eq.f32.partialorder %v1028, 8.507059e+37
        %v1030 = vand.u32 %v1018, 2147483648
        %v1031 = vor.u32 1.1754944e-38, %v1030
        %v1032 = vsel %vm1029, %v1031, %v1027
        %v1033 = vmul.f32 %v1015, %v1032
        %1034 = vrot.lane.b32.xlu0 %v977, 64
        %v1035 = vpop.permute.xlu0 %1034
        %vm1036 = vcmask 39936
        %v1038 = vsel %vm1036, %v1033, 0
        %vm1040 = vcmask 1044480
        %v1041 = vsel %vm1040, %v1035, 0
        %1043 = vmatpush.msra.mxu0 0.0
        %1044 = vmatpush.msra.mxu0 0.0
        %1045 = vmatpush.msra.mxu0 0.0
        %1046 = vmatpush.msra.mxu0 0.0
        %1047 = vmatpush.msra.mxu0 0.0
        %1048 = vmatpush.msra.mxu0 0.0
        %1049 = vmatpush.msra.mxu0 0.0
        %1050 = vmatpush.msra.mxu0 0.0
        %1051 = vmatpush.msra.mxu0 0.0
        %1052 = vmatpush.msra.mxu0 0.0
        %1053 = vmatpush.msra.mxu0 0.0
        %1054 = vmatpush.msra.mxu0 0.0
        %1055 = vmatpush.msra.mxu0 0.0
        %1056 = vmatpush.msra.mxu0 0.0
        %1057 = vmatpush.msra.mxu0 0.0
        %1058 = vmatpush.msra.mxu0 %v1041
        %1059 = vmatmul.f32.gmra.mxu0 %v1038
        %v1060 = vpop.f32.mrf.mxu0
        %v1061 = vadd.f32 0.0, %v1060
        %1062 = vdwg.mxu0
        %1063 = vrot.lane.b32.xlu0 %v979, 120
        %v1064 = vpop.permute.xlu0 %1063
        %1065 = vrot.lane.b32.xlu0 %v977, 88
        %v1066 = vpop.permute.xlu0 %1065
        %v1067 = vsel %vm983, %v1064, 0
        %v1069 = vsel %vm983, %v1066, 0
        %1071 = vmatpush.xpose.msra.mxu0 0.0
        %1072 = vmatpush.xpose.msra.mxu0 0.0
        %1073 = vmatpush.xpose.msra.mxu0 0.0
        %1074 = vmatpush.xpose.msra.mxu0 0.0
        %1075 = vmatpush.xpose.msra.mxu0 0.0
        %1076 = vmatpush.xpose.msra.mxu0 0.0
        %1077 = vmatpush.xpose.msra.mxu0 0.0
        %1078 = vmatpush.xpose.msra.mxu0 0.0
        %1079 = vmatpush.xpose.msra.mxu0 0.0
        %1080 = vmatpush.xpose.msra.mxu0 0.0
        %1081 = vmatpush.xpose.msra.mxu0 0.0
        %1082 = vmatpush.xpose.msra.mxu0 0.0
        %1083 = vmatpush.xpose.msra.mxu0 0.0
        %1084 = vmatpush.xpose.msra.mxu0 0.0
        %1085 = vmatpush.xpose.msra.mxu0 0.0
        %1086 = vmatpush.xpose.msra.mxu0 %v1069
        %1087 = vmatmul.f32.gmra.mxu0 %v1067
        %v1088 = vpop.f32.mrf.mxu0
        %v1089 = vadd.f32 0.0, %v1088
        %1090 = vdwg.mxu0
        %v1091 = vsel %vm1009, %v1089, -inf
        %1092 = vmax.xlane.f32.xlu0 %v1091
        %v1093 = vpop.xlane.xlu0 %1092
        %v1094 = vsub.f32 %v1089, %v1093
        %v1095 = vmul.f32 %v1094, 1.442695
        %v1096 = vpow.pop %v1095
        %v1097 = vsel %vm1009, %v1096, 0.0
        %1098 = vadd.xlane.f32.xlu0 %v1097
        %v1099 = vpop.xlane.xlu0 %1098
        %v1100 = vrcp.pop %v1099
        %v1101 = vmul.f32 %v1099, %v1100
        %v1102 = vsub.f32 1.0, %v1101
        %v1103 = vmul.f32 %v1100, %v1102
        %v1104 = vadd.f32 %v1100, %v1103
        %vm1105 = vweird.f32 %v1099
        %vm1106 = vweird.f32 %v1100
        %vm1107 = vmor %vm1105, %vm1106
        %v1108 = vsel %vm1107, %v1100, %v1104
        %v1109 = vand.u32 2147483647, %v1099
        %vm1110 = vcmp.eq.f32.partialorder %v1109, 8.507059e+37
        %v1111 = vand.u32 %v1099, 2147483648
        %v1112 = vor.u32 1.1754944e-38, %v1111
        %v1113 = vsel %vm1110, %v1112, %v1108
        %v1114 = vmul.f32 %v1096, %v1113
        %1115 = vrot.lane.b32.xlu0 %v977, 56
        %v1116 = vpop.permute.xlu0 %1115
        %v1118 = vsel %vm1036, %v1114, 0
        %v1120 = vsel %vm1040, %v1116, 0
        %1122 = vmatpush.msra.mxu0 0.0
        %1123 = vmatpush.msra.mxu0 0.0
        %1124 = vmatpush.msra.mxu0 0.0
        %1125 = vmatpush.msra.mxu0 0.0
        %1126 = vmatpush.msra.mxu0 0.0
        %1127 = vmatpush.msra.mxu0 0.0
        %1128 = vmatpush.msra.mxu0 0.0
        %1129 = vmatpush.msra.mxu0 0.0
        %1130 = vmatpush.msra.mxu0 0.0
        %1131 = vmatpush.msra.mxu0 0.0
        %1132 = vmatpush.msra.mxu0 0.0
        %1133 = vmatpush.msra.mxu0 0.0
        %1134 = vmatpush.msra.mxu0 0.0
        %1135 = vmatpush.msra.mxu0 0.0
        %1136 = vmatpush.msra.mxu0 0.0
        %1137 = vmatpush.msra.mxu0 %v1120
        %1138 = vmatmul.f32.gmra.mxu0 %v1118
        %v1139 = vpop.f32.mrf.mxu0
        %v1140 = vadd.f32 0.0, %v1139
        %1141 = vdwg.mxu0
        %1142 = vrot.lane.b32.xlu0 %v979, 112
        %v1143 = vpop.permute.xlu0 %1142
        %1144 = vrot.lane.b32.xlu0 %v977, 80
        %v1145 = vpop.permute.xlu0 %1144
        %v1146 = vsel %vm983, %v1143, 0
        %v1148 = vsel %vm983, %v1145, 0
        %1150 = vmatpush.xpose.msra.mxu0 0.0
        %1151 = vmatpush.xpose.msra.mxu0 0.0
        %1152 = vmatpush.xpose.msra.mxu0 0.0
        %1153 = vmatpush.xpose.msra.mxu0 0.0
        %1154 = vmatpush.xpose.msra.mxu0 0.0
        %1155 = vmatpush.xpose.msra.mxu0 0.0
        %1156 = vmatpush.xpose.msra.mxu0 0.0
        %1157 = vmatpush.xpose.msra.mxu0 0.0
        %1158 = vmatpush.xpose.msra.mxu0 0.0
        %1159 = vmatpush.xpose.msra.mxu0 0.0
        %1160 = vmatpush.xpose.msra.mxu0 0.0
        %1161 = vmatpush.xpose.msra.mxu0 0.0
        %1162 = vmatpush.xpose.msra.mxu0 0.0
        %1163 = vmatpush.xpose.msra.mxu0 0.0
        %1164 = vmatpush.xpose.msra.mxu0 0.0
        %1165 = vmatpush.xpose.msra.mxu0 %v1148
        %1166 = vmatmul.f32.gmra.mxu0 %v1146
        %v1167 = vpop.f32.mrf.mxu0
        %v1168 = vadd.f32 0.0, %v1167
        %1169 = vdwg.mxu0
        %v1170 = vsel %vm1009, %v1168, -inf
        %1171 = vmax.xlane.f32.xlu0 %v1170
        %v1172 = vpop.xlane.xlu0 %1171
        %v1173 = vsub.f32 %v1168, %v1172
        %v1174 = vmul.f32 %v1173, 1.442695
        %v1175 = vpow.pop %v1174
        %v1176 = vsel %vm1009, %v1175, 0.0
        %1177 = vadd.xlane.f32.xlu0 %v1176
        %v1178 = vpop.xlane.xlu0 %1177
        %v1179 = vrcp.pop %v1178
        %v1180 = vmul.f32 %v1178, %v1179
        %v1181 = vsub.f32 1.0, %v1180
        %v1182 = vmul.f32 %v1179, %v1181
        %v1183 = vadd.f32 %v1179, %v1182
        %vm1184 = vweird.f32 %v1178
        %vm1185 = vweird.f32 %v1179
        %vm1186 = vmor %vm1184, %vm1185
        %v1187 = vsel %vm1186, %v1179, %v1183
        %v1188 = vand.u32 2147483647, %v1178
        %vm1189 = vcmp.eq.f32.partialorder %v1188, 8.507059e+37
        %v1190 = vand.u32 %v1178, 2147483648
        %v1191 = vor.u32 1.1754944e-38, %v1190
        %v1192 = vsel %vm1189, %v1191, %v1187
        %v1193 = vmul.f32 %v1175, %v1192
        %1194 = vrot.lane.b32.xlu0 %v977, 48
        %v1195 = vpop.permute.xlu0 %1194
        %v1197 = vsel %vm1036, %v1193, 0
        %v1199 = vsel %vm1040, %v1195, 0
        %1201 = vmatpush.msra.mxu0 0.0
        %1202 = vmatpush.msra.mxu0 0.0
        %1203 = vmatpush.msra.mxu0 0.0
        %1204 = vmatpush.msra.mxu0 0.0
        %1205 = vmatpush.msra.mxu0 0.0
        %1206 = vmatpush.msra.mxu0 0.0
        %1207 = vmatpush.msra.mxu0 0.0
        %1208 = vmatpush.msra.mxu0 0.0
        %1209 = vmatpush.msra.mxu0 0.0
        %1210 = vmatpush.msra.mxu0 0.0
        %1211 = vmatpush.msra.mxu0 0.0
        %1212 = vmatpush.msra.mxu0 0.0
        %1213 = vmatpush.msra.mxu0 0.0
        %1214 = vmatpush.msra.mxu0 0.0
        %1215 = vmatpush.msra.mxu0 0.0
        %1216 = vmatpush.msra.mxu0 %v1199
        %1217 = vmatmul.f32.gmra.mxu0 %v1197
        %v1218 = vpop.f32.mrf.mxu0
        %v1219 = vadd.f32 0.0, %v1218
        %1220 = vdwg.mxu0
        %1221 = vrot.lane.b32.xlu0 %v979, 104
        %v1222 = vpop.permute.xlu0 %1221
        %1223 = vrot.lane.b32.xlu0 %v977, 72
        %v1224 = vpop.permute.xlu0 %1223
        %v1225 = vsel %vm983, %v1222, 0
        %v1227 = vsel %vm983, %v1224, 0
        %1229 = vmatpush.xpose.msra.mxu0 0.0
        %1230 = vmatpush.xpose.msra.mxu0 0.0
        %1231 = vmatpush.xpose.msra.mxu0 0.0
        %1232 = vmatpush.xpose.msra.mxu0 0.0
        %1233 = vmatpush.xpose.msra.mxu0 0.0
        %1234 = vmatpush.xpose.msra.mxu0 0.0
        %1235 = vmatpush.xpose.msra.mxu0 0.0
        %1236 = vmatpush.xpose.msra.mxu0 0.0
        %1237 = vmatpush.xpose.msra.mxu0 0.0
        %1238 = vmatpush.xpose.msra.mxu0 0.0
        %1239 = vmatpush.xpose.msra.mxu0 0.0
        %1240 = vmatpush.xpose.msra.mxu0 0.0
        %1241 = vmatpush.xpose.msra.mxu0 0.0
        %1242 = vmatpush.xpose.msra.mxu0 0.0
        %1243 = vmatpush.xpose.msra.mxu0 0.0
        %1244 = vmatpush.xpose.msra.mxu0 %v1227
        %1245 = vmatmul.f32.gmra.mxu0 %v1225
        %v1246 = vpop.f32.mrf.mxu0
        %v1247 = vadd.f32 0.0, %v1246
        %1248 = vdwg.mxu0
        %v1249 = vsel %vm1009, %v1247, -inf
        %1250 = vmax.xlane.f32.xlu0 %v1249
        %v1251 = vpop.xlane.xlu0 %1250
        %v1252 = vsub.f32 %v1247, %v1251
        %v1253 = vmul.f32 %v1252, 1.442695
        %v1254 = vpow.pop %v1253
        %v1255 = vsel %vm1009, %v1254, 0.0
        %1256 = vadd.xlane.f32.xlu0 %v1255
        %v1257 = vpop.xlane.xlu0 %1256
        %v1258 = vrcp.pop %v1257
        %v1259 = vmul.f32 %v1257, %v1258
        %v1260 = vsub.f32 1.0, %v1259
        %v1261 = vmul.f32 %v1258, %v1260
        %v1262 = vadd.f32 %v1258, %v1261
        %vm1263 = vweird.f32 %v1257
        %vm1264 = vweird.f32 %v1258
        %vm1265 = vmor %vm1263, %vm1264
        %v1266 = vsel %vm1265, %v1258, %v1262
        %v1267 = vand.u32 2147483647, %v1257
        %vm1268 = vcmp.eq.f32.partialorder %v1267, 8.507059e+37
        %v1269 = vand.u32 %v1257, 2147483648
        %v1270 = vor.u32 1.1754944e-38, %v1269
        %v1271 = vsel %vm1268, %v1270, %v1266
        %v1272 = vmul.f32 %v1254, %v1271
        %1273 = vrot.lane.b32.xlu0 %v977, 40
        %v1274 = vpop.permute.xlu0 %1273
        %v1276 = vsel %vm1036, %v1272, 0
        %v1278 = vsel %vm1040, %v1274, 0
        %1280 = vmatpush.msra.mxu0 0.0
        %1281 = vmatpush.msra.mxu0 0.0
        %1282 = vmatpush.msra.mxu0 0.0
        %1283 = vmatpush.msra.mxu0 0.0
        %1284 = vmatpush.msra.mxu0 0.0
        %1285 = vmatpush.msra.mxu0 0.0
        %1286 = vmatpush.msra.mxu0 0.0
        %1287 = vmatpush.msra.mxu0 0.0
        %1288 = vmatpush.msra.mxu0 0.0
        %1289 = vmatpush.msra.mxu0 0.0
        %1290 = vmatpush.msra.mxu0 0.0
        %1291 = vmatpush.msra.mxu0 0.0
        %1292 = vmatpush.msra.mxu0 0.0
        %1293 = vmatpush.msra.mxu0 0.0
        %1294 = vmatpush.msra.mxu0 0.0
        %1295 = vmatpush.msra.mxu0 %v1278
        %1296 = vmatmul.f32.gmra.mxu0 %v1276
        %v1297 = vpop.f32.mrf.mxu0
        %v1298 = vadd.f32 0.0, %v1297
        %1299 = vdwg.mxu0
        %1301 = vrot.lane.b32.xlu0 %v1140, 8
        %v1302 = vpop.permute.xlu0 %1301
        %1305 = vrot.lane.b32.xlu0 %v1219, 16
        %v1306 = vpop.permute.xlu0 %1305
        %1309 = vrot.lane.b32.xlu0 %v1298, 24
        %v1310 = vpop.permute.xlu0 %1309
        %v1312 = vsel %vm983, %v1061, %v1302
        %vm1313 = vcmask 130048
        %v1314 = vsel %vm1313, %v1312, %v1306
        %vm1315 = vcmask 195584
        %v1316 = vsel %vm1315, %v1314, %v1310
        %v1317 = vld [vmem:[%s9] sm:$0xff]
        %v1318 = vld [vmem:[%s9 + $0x8] sm:$0xff]
        %v1319 = vld [vmem:[%s9 + $0x10] sm:$0xff]
        %v1320 = vld [vmem:[%s9 + $0x18] sm:$0xff]
        %v1322 = vsel %vm955, %v1316, 0
        %1324 = vmatpush.msra.mxu0 0.0
        %1325 = vmatpush.msra.mxu0 0.0
        %1326 = vmatpush.msra.mxu0 0.0
        %1327 = vmatpush.msra.mxu0 0.0
        %1328 = vmatpush.msra.mxu0 0.0
        %1329 = vmatpush.msra.mxu0 0.0
        %1330 = vmatpush.msra.mxu0 0.0
        %1331 = vmatpush.msra.mxu0 0.0
        %1332 = vmatpush.msra.mxu0 0.0
        %1333 = vmatpush.msra.mxu0 0.0
        %1334 = vmatpush.msra.mxu0 0.0
        %1335 = vmatpush.msra.mxu0 0.0
        %1336 = vmatpush.msra.mxu0 %v1320
        %1337 = vmatpush.msra.mxu0 %v1319
        %1338 = vmatpush.msra.mxu0 %v1318
        %1339 = vmatpush.msra.mxu0 %v1317
        %1340 = vmatmul.f32.gmra.mxu0 %v1322
        %v1341 = vpop.f32.mrf.mxu0
        %v1342 = vadd.f32 0.0, %v1341
        %1343 = vdwg.mxu0
        %v1344 = vadd.f32 %v906, %v1342
        %v1345 = vld [vmem:[%s10] sm:$0x1]
        %v1347 = vperm.slane %v1345, 0
        %v1349 = vadd.f32 %v1344, %v1347
        %v1350 = vld [vmem:[%s11] sm:$0x1]
        %v1351 = vld [vmem:[%s12] sm:$0x1]
        %v1352 = vsel %vm909, %v1349, 0.0
        %1353 = vadd.xlane.f32.xlu0 %v1352
        %v1354 = vpop.xlane.xlu0 %1353
        %v1355 = vmul.f32 %v1354, %v919
        %v1356 = vsub.f32 %v1349, %v1355
        %v1357 = vmul.f32 %v1356, %v1356
        %v1358 = vsel %vm909, %v1357, 0.0
        %1359 = vadd.xlane.f32.xlu0 %v1358
        %v1360 = vpop.xlane.xlu0 %1359
        %v1361 = vmul.f32 %v1360, %v919
        %v1362 = vadd.f32 %v1361, 1e-06
        %v1363 = vrsqrt.pop %v1362
        %v1364 = vmul.f32 %v1363, %v1362
        %v1365 = vmul.f32 %v1364, %v1363
        %v1366 = vmul.f32 0.5, %v1365
        %v1367 = vsub.f32 1.5, %v1366
        %v1368 = vmul.f32 %v1363, %v1367
        %vm1369 = vweird.f32 %v1362
        %vm1370 = vweird.f32 %v1363
        %vm1371 = vmor %vm1369, %vm1370
        %v1372 = vsel %vm1371, %v1363, %v1368
        %v1373 = vmul.f32 %v1356, %v1372
        %v1375 = vperm.slane %v1350, 0
        %v1377 = vmul.f32 %v1373, %v1375
        %v1379 = vperm.slane %v1351, 0
        %v1381 = vadd.f32 %v1377, %v1379
        %v1382 = vld [vmem:[%s13] sm:$0xff]
        %v1383 = vld [vmem:[%s13 + $0x8] sm:$0xff]
        %v1384 = vld [vmem:[%s13 + $0x10] sm:$0xff]
        %v1385 = vld [vmem:[%s13 + $0x18] sm:$0xff]
        %v1386 = vld [vmem:[%s14] sm:$0x1]
        %v1388 = vperm.slane %v1386, 0
        %v1391 = vsel %vm955, %v1381, 0
        %1393 = vmatpush.msra.mxu0 0.0
        %1394 = vmatpush.msra.mxu0 0.0
        %1395 = vmatpush.msra.mxu0 0.0
        %1396 = vmatpush.msra.mxu0 0.0
        %1397 = vmatpush.msra.mxu0 0.0
        %1398 = vmatpush.msra.mxu0 0.0
        %1399 = vmatpush.msra.mxu0 0.0
        %1400 = vmatpush.msra.mxu0 0.0
        %1401 = vmatpush.msra.mxu0 0.0
        %1402 = vmatpush.msra.mxu0 0.0
        %1403 = vmatpush.msra.mxu0 0.0
        %1404 = vmatpush.msra.mxu0 0.0
        %1405 = vmatpush.msra.mxu0 %v1385
        %1406 = vmatpush.msra.mxu0 %v1384
        %1407 = vmatpush.msra.mxu0 %v1383
        %1408 = vmatpush.msra.mxu0 %v1382
        %1409 = vmatmul.f32.gmra.mxu0 %v1391
        %v1410 = vpop.f32.mrf.mxu0
        %v1411 = vadd.f32 %v1388, %v1410
        %1412 = vdwg.mxu0
        %v1413 = vmul.f32 %v1411, 0.5
        %v1414 = vmul.f32 %v1411, 0.70710677
        %v1415 = vmul.f32 %v1414, %v1414
        %v1416 = vmin.f32 16.0, %v1415
        %v1417 = vmul.f32 %v1416, 2.1237322e-06
        %v1418 = vadd.f32 %v1417, 0.00028619796
        %v1419 = vmul.f32 %v1416, %v1418
        %v1420 = vadd.f32 %v1419, 0.0036580483
        %v1421 = vmul.f32 %v1416, %v1420
        %v1422 = vadd.f32 %v1421, 0.05243302
        %v1423 = vmul.f32 %v1416, %v1422
        %v1424 = vadd.f32 %v1423, 0.18741608
        %v1425 = vmul.f32 %v1416, %v1424
        %v1426 = vadd.f32 %v1425, 1.1283791
        %v1427 = vmul.f32 %v1414, %v1426
        %v1428 = vmul.f32 %v1416, 3.8918573e-05
        %v1429 = vadd.f32 %v1428, 0.001143296
        %v1430 = vmul.f32 %v1416, %v1429
        %v1431 = vadd.f32 %v1430, 0.014752088
        %v1432 = vmul.f32 %v1416, %v1431
        %v1433 = vadd.f32 %v1432, 0.112945676
        %v1434 = vmul.f32 %v1416, %v1433
        %v1435 = vadd.f32 %v1434, 0.4994258
        %v1436 = vmul.f32 %v1416, %v1435
        %v1437 = vadd.f32 %v1436, 1.0
        %v1438 = vrcp.pop %v1437
        %v1439 = vmul.f32 %v1437, %v1438
        %v1440 = vsub.f32 1.0, %v1439
        %v1441 = vmul.f32 %v1438, %v1440
        %v1442 = vadd.f32 %v1438, %v1441
        %vm1443 = vweird.f32 %v1437
        %vm1444 = vweird.f32 %v1438
        %vm1445 = vmor %vm1443, %vm1444
        %v1446 = vsel %vm1445, %v1438, %v1442
        %v1447 = vand.u32 2147483647, %v1437
        %vm1448 = vcmp.eq.f32.partialorder %v1447, 8.507059e+37
        %v1449 = vand.u32 %v1437, 2147483648
        %v1450 = vor.u32 1.1754944e-38, %v1449
        %v1451 = vsel %vm1448, %v1450, %v1446
        %v1452 = vmul.f32 %v1427, %v1451
        %v1453 = vmin.f32 %v1452, 1.0
        %v1454 = vmax.f32 %v1453, -1.0
        %v1455 = vadd.f32 %v1454, 1.0
        %v1456 = vmul.f32 %v1413, %v1455
        %v1457 = vld [vmem:[%s15] sm:$0xff]
        %v1458 = vld [vmem:[%s15 + $0x8] sm:$0xff]
        %v1459 = vld [vmem:[%s15 + $0x10] sm:$0xff]
        %v1460 = vld [vmem:[%s15 + $0x18] sm:$0xff]
        %v1461 = vld [vmem:[%s15 + $0x20] sm:$0xff]
        %v1462 = vld [vmem:[%s15 + $0x28] sm:$0xff]
        %v1463 = vld [vmem:[%s15 + $0x30] sm:$0xff]
        %v1464 = vld [vmem:[%s15 + $0x38] sm:$0xff]
        %v1465 = vld [vmem:[%s15 + $0x40] sm:$0xff]
        %v1466 = vld [vmem:[%s15 + $0x48] sm:$0xff]
        %v1467 = vld [vmem:[%s15 + $0x50] sm:$0xff]
        %v1468 = vld [vmem:[%s15 + $0x58] sm:$0xff]
        %v1469 = vld [vmem:[%s15 + $0x60] sm:$0xff]
        %v1470 = vld [vmem:[%s15 + $0x68] sm:$0xff]
        %v1471 = vld [vmem:[%s15 + $0x70] sm:$0xff]
        %v1472 = vld [vmem:[%s15 + $0x78] sm:$0xff]
        %1473 = vmatpush.msra.mxu0 %v1472
        %1474 = vmatpush.msra.mxu0 %v1471
        %1475 = vmatpush.msra.mxu0 %v1470
        %1476 = vmatpush.msra.mxu0 %v1469
        %1477 = vmatpush.msra.mxu0 %v1468
        %1478 = vmatpush.msra.mxu0 %v1467
        %1479 = vmatpush.msra.mxu0 %v1466
        %1480 = vmatpush.msra.mxu0 %v1465
        %1481 = vmatpush.msra.mxu0 %v1464
        %1482 = vmatpush.msra.mxu0 %v1463
        %1483 = vmatpush.msra.mxu0 %v1462
        %1484 = vmatpush.msra.mxu0 %v1461
        %1485 = vmatpush.msra.mxu0 %v1460
        %1486 = vmatpush.msra.mxu0 %v1459
        %1487 = vmatpush.msra.mxu0 %v1458
        %1488 = vmatpush.msra.mxu0 %v1457
        %1489 = vmatmul.f32.gmra.mxu0 %v1456
        %v1490 = vpop.f32.mrf.mxu0
        %v1491 = vadd.f32 0.0, %v1490
        %1492 = vdwg.mxu0
        %v1493 = vadd.f32 %v1349, %v1491
        %v1494 = vld [vmem:[%s16] sm:$0x1]
        %v1496 = vperm.slane %v1494, 0
        %v1498 = vadd.f32 %v1493, %v1496
        %s1499 = scalar_lea.vmem %s5, 1
        %v1500 = vld [vmem:[%s1499] sm:$0x1]
        %s1501 = scalar_lea.vmem %s6, 1
        %v1502 = vld [vmem:[%s1501] sm:$0x1]
        %v1503 = vsel %vm909, %v1498, 0.0
        %1504 = vadd.xlane.f32.xlu0 %v1503
        %v1505 = vpop.xlane.xlu0 %1504
        %v1506 = vmul.f32 %v1505, %v919
        %v1507 = vsub.f32 %v1498, %v1506
        %v1508 = vmul.f32 %v1507, %v1507
        %v1509 = vsel %vm909, %v1508, 0.0
        %1510 = vadd.xlane.f32.xlu0 %v1509
        %v1511 = vpop.xlane.xlu0 %1510
        %v1512 = vmul.f32 %v1511, %v919
        %v1513 = vadd.f32 %v1512, 1e-06
        %v1514 = vrsqrt.pop %v1513
        %v1515 = vmul.f32 %v1514, %v1513
        %v1516 = vmul.f32 %v1515, %v1514
        %v1517 = vmul.f32 0.5, %v1516
        %v1518 = vsub.f32 1.5, %v1517
        %v1519 = vmul.f32 %v1514, %v1518
        %vm1520 = vweird.f32 %v1513
        %vm1521 = vweird.f32 %v1514
        %vm1522 = vmor %vm1520, %vm1521
        %v1523 = vsel %vm1522, %v1514, %v1519
        %v1524 = vmul.f32 %v1507, %v1523
        %v1526 = vperm.slane %v1500, 0
        %v1528 = vmul.f32 %v1524, %v1526
        %v1530 = vperm.slane %v1502, 0
        %v1532 = vadd.f32 %v1528, %v1530
        %s1533 = scalar_lea.vmem %s7, 32
        %v1534 = vld [vmem:[%s1533] sm:$0xff]
        %v1535 = vld [vmem:[%s1533 + $0x8] sm:$0xff]
        %v1536 = vld [vmem:[%s1533 + $0x10] sm:$0xff]
        %v1537 = vld [vmem:[%s1533 + $0x18] sm:$0xff]
        %s1538 = scalar_lea.vmem %s8, 1
        %v1539 = vld [vmem:[%s1538] sm:$0x1]
        %v1541 = vperm.slane %v1539, 0
        %v1544 = vsel %vm955, %v1532, 0
        %1546 = vmatpush.msra.mxu0 0.0
        %1547 = vmatpush.msra.mxu0 0.0
        %1548 = vmatpush.msra.mxu0 0.0
        %1549 = vmatpush.msra.mxu0 0.0
        %1550 = vmatpush.msra.mxu0 0.0
        %1551 = vmatpush.msra.mxu0 0.0
        %1552 = vmatpush.msra.mxu0 0.0
        %1553 = vmatpush.msra.mxu0 0.0
        %1554 = vmatpush.msra.mxu0 0.0
        %1555 = vmatpush.msra.mxu0 0.0
        %1556 = vmatpush.msra.mxu0 0.0
        %1557 = vmatpush.msra.mxu0 0.0
        %1558 = vmatpush.msra.mxu0 %v1537
        %1559 = vmatpush.msra.mxu0 %v1536
        %1560 = vmatpush.msra.mxu0 %v1535
        %1561 = vmatpush.msra.mxu0 %v1534
        %1562 = vmatmul.f32.gmra.mxu0 %v1544
        %v1563 = vpop.f32.mrf.mxu0
        %v1564 = vadd.f32 %v1541, %v1563
        %1565 = vdwg.mxu0
        %v1566 = vmul.f32 %v1564, 0.35355338
        %1568 = vrot.lane.b32.xlu0 %v1564, 96
        %v1569 = vpop.permute.xlu0 %1568
        %v1571 = vsel %vm983, %v1566, 0
        %v1573 = vsel %vm983, %v1569, 0
        %1575 = vmatpush.xpose.msra.mxu0 0.0
        %1576 = vmatpush.xpose.msra.mxu0 0.0
        %1577 = vmatpush.xpose.msra.mxu0 0.0
        %1578 = vmatpush.xpose.msra.mxu0 0.0
        %1579 = vmatpush.xpose.msra.mxu0 0.0
        %1580 = vmatpush.xpose.msra.mxu0 0.0
        %1581 = vmatpush.xpose.msra.mxu0 0.0
        %1582 = vmatpush.xpose.msra.mxu0 0.0
        %1583 = vmatpush.xpose.msra.mxu0 0.0
        %1584 = vmatpush.xpose.msra.mxu0 0.0
        %1585 = vmatpush.xpose.msra.mxu0 0.0
        %1586 = vmatpush.xpose.msra.mxu0 0.0
        %1587 = vmatpush.xpose.msra.mxu0 0.0
        %1588 = vmatpush.xpose.msra.mxu0 0.0
        %1589 = vmatpush.xpose.msra.mxu0 0.0
        %1590 = vmatpush.xpose.msra.mxu0 %v1573
        %1591 = vmatmul.f32.gmra.mxu0 %v1571
        %v1592 = vpop.f32.mrf.mxu0
        %v1593 = vadd.f32 0.0, %v1592
        %1594 = vdwg.mxu0
        %v1595 = vsel %vm1009, %v1593, -inf
        %1596 = vmax.xlane.f32.xlu0 %v1595
        %v1597 = vpop.xlane.xlu0 %1596
        %v1598 = vsub.f32 %v1593, %v1597
        %v1599 = vmul.f32 %v1598, 1.442695
        %v1600 = vpow.pop %v1599
        %v1601 = vsel %vm1009, %v1600, 0.0
        %1602 = vadd.xlane.f32.xlu0 %v1601
        %v1603 = vpop.xlane.xlu0 %1602
        %v1604 = vrcp.pop %v1603
        %v1605 = vmul.f32 %v1603, %v1604
        %v1606 = vsub.f32 1.0, %v1605
        %v1607 = vmul.f32 %v1604, %v1606
        %v1608 = vadd.f32 %v1604, %v1607
        %vm1609 = vweird.f32 %v1603
        %vm1610 = vweird.f32 %v1604
        %vm1611 = vmor %vm1609, %vm1610
        %v1612 = vsel %vm1611, %v1604, %v1608
        %v1613 = vand.u32 2147483647, %v1603
        %vm1614 = vcmp.eq.f32.partialorder %v1613, 8.507059e+37
        %v1615 = vand.u32 %v1603, 2147483648
        %v1616 = vor.u32 1.1754944e-38, %v1615
        %v1617 = vsel %vm1614, %v1616, %v1612
        %v1618 = vmul.f32 %v1600, %v1617
        %1619 = vrot.lane.b32.xlu0 %v1564, 64
        %v1620 = vpop.permute.xlu0 %1619
        %v1622 = vsel %vm1036, %v1618, 0
        %v1624 = vsel %vm1040, %v1620, 0
        %1626 = vmatpush.msra.mxu0 0.0
        %1627 = vmatpush.msra.mxu0 0.0
        %1628 = vmatpush.msra.mxu0 0.0
        %1629 = vmatpush.msra.mxu0 0.0
        %1630 = vmatpush.msra.mxu0 0.0
        %1631 = vmatpush.msra.mxu0 0.0
        %1632 = vmatpush.msra.mxu0 0.0
        %1633 = vmatpush.msra.mxu0 0.0
        %1634 = vmatpush.msra.mxu0 0.0
        %1635 = vmatpush.msra.mxu0 0.0
        %1636 = vmatpush.msra.mxu0 0.0
        %1637 = vmatpush.msra.mxu0 0.0
        %1638 = vmatpush.msra.mxu0 0.0
        %1639 = vmatpush.msra.mxu0 0.0
        %1640 = vmatpush.msra.mxu0 0.0
        %1641 = vmatpush.msra.mxu0 %v1624
        %1642 = vmatmul.f32.gmra.mxu0 %v1622
        %v1643 = vpop.f32.mrf.mxu0
        %v1644 = vadd.f32 0.0, %v1643
        %1645 = vdwg.mxu0
        %1646 = vrot.lane.b32.xlu0 %v1566, 120
        %v1647 = vpop.permute.xlu0 %1646
        %1648 = vrot.lane.b32.xlu0 %v1564, 88
        %v1649 = vpop.permute.xlu0 %1648
        %v1650 = vsel %vm983, %v1647, 0
        %v1652 = vsel %vm983, %v1649, 0
        %1654 = vmatpush.xpose.msra.mxu0 0.0
        %1655 = vmatpush.xpose.msra.mxu0 0.0
        %1656 = vmatpush.xpose.msra.mxu0 0.0
        %1657 = vmatpush.xpose.msra.mxu0 0.0
        %1658 = vmatpush.xpose.msra.mxu0 0.0
        %1659 = vmatpush.xpose.msra.mxu0 0.0
        %1660 = vmatpush.xpose.msra.mxu0 0.0
        %1661 = vmatpush.xpose.msra.mxu0 0.0
        %1662 = vmatpush.xpose.msra.mxu0 0.0
        %1663 = vmatpush.xpose.msra.mxu0 0.0
        %1664 = vmatpush.xpose.msra.mxu0 0.0
        %1665 = vmatpush.xpose.msra.mxu0 0.0
        %1666 = vmatpush.xpose.msra.mxu0 0.0
        %1667 = vmatpush.xpose.msra.mxu0 0.0
        %1668 = vmatpush.xpose.msra.mxu0 0.0
        %1669 = vmatpush.xpose.msra.mxu0 %v1652
        %1670 = vmatmul.f32.gmra.mxu0 %v1650
        %v1671 = vpop.f32.mrf.mxu0
        %v1672 = vadd.f32 0.0, %v1671
        %1673 = vdwg.mxu0
        %v1674 = vsel %vm1009, %v1672, -inf
        %1675 = vmax.xlane.f32.xlu0 %v1674
        %v1676 = vpop.xlane.xlu0 %1675
        %v1677 = vsub.f32 %v1672, %v1676
        %v1678 = vmul.f32 %v1677, 1.442695
        %v1679 = vpow.pop %v1678
        %v1680 = vsel %vm1009, %v1679, 0.0
        %1681 = vadd.xlane.f32.xlu0 %v1680
        %v1682 = vpop.xlane.xlu0 %1681
        %v1683 = vrcp.pop %v1682
        %v1684 = vmul.f32 %v1682, %v1683
        %v1685 = vsub.f32 1.0, %v1684
        %v1686 = vmul.f32 %v1683, %v1685
        %v1687 = vadd.f32 %v1683, %v1686
        %vm1688 = vweird.f32 %v1682
        %vm1689 = vweird.f32 %v1683
        %vm1690 = vmor %vm1688, %vm1689
        %v1691 = vsel %vm1690, %v1683, %v1687
        %v1692 = vand.u32 2147483647, %v1682
        %vm1693 = vcmp.eq.f32.partialorder %v1692, 8.507059e+37
        %v1694 = vand.u32 %v1682, 2147483648
        %v1695 = vor.u32 1.1754944e-38, %v1694
        %v1696 = vsel %vm1693, %v1695, %v1691
        %v1697 = vmul.f32 %v1679, %v1696
        %1698 = vrot.lane.b32.xlu0 %v1564, 56
        %v1699 = vpop.permute.xlu0 %1698
        %v1701 = vsel %vm1036, %v1697, 0
        %v1703 = vsel %vm1040, %v1699, 0
        %1705 = vmatpush.msra.mxu0 0.0
        %1706 = vmatpush.msra.mxu0 0.0
        %1707 = vmatpush.msra.mxu0 0.0
        %1708 = vmatpush.msra.mxu0 0.0
        %1709 = vmatpush.msra.mxu0 0.0
        %1710 = vmatpush.msra.mxu0 0.0
        %1711 = vmatpush.msra.mxu0 0.0
        %1712 = vmatpush.msra.mxu0 0.0
        %1713 = vmatpush.msra.mxu0 0.0
        %1714 = vmatpush.msra.mxu0 0.0
        %1715 = vmatpush.msra.mxu0 0.0
        %1716 = vmatpush.msra.mxu0 0.0
        %1717 = vmatpush.msra.mxu0 0.0
        %1718 = vmatpush.msra.mxu0 0.0
        %1719 = vmatpush.msra.mxu0 0.0
        %1720 = vmatpush.msra.mxu0 %v1703
        %1721 = vmatmul.f32.gmra.mxu0 %v1701
        %v1722 = vpop.f32.mrf.mxu0
        %v1723 = vadd.f32 0.0, %v1722
        %1724 = vdwg.mxu0
        %1725 = vrot.lane.b32.xlu0 %v1566, 112
        %v1726 = vpop.permute.xlu0 %1725
        %1727 = vrot.lane.b32.xlu0 %v1564, 80
        %v1728 = vpop.permute.xlu0 %1727
        %v1729 = vsel %vm983, %v1726, 0
        %v1731 = vsel %vm983, %v1728, 0
        %1733 = vmatpush.xpose.msra.mxu0 0.0
        %1734 = vmatpush.xpose.msra.mxu0 0.0
        %1735 = vmatpush.xpose.msra.mxu0 0.0
        %1736 = vmatpush.xpose.msra.mxu0 0.0
        %1737 = vmatpush.xpose.msra.mxu0 0.0
        %1738 = vmatpush.xpose.msra.mxu0 0.0
        %1739 = vmatpush.xpose.msra.mxu0 0.0
        %1740 = vmatpush.xpose.msra.mxu0 0.0
        %1741 = vmatpush.xpose.msra.mxu0 0.0
        %1742 = vmatpush.xpose.msra.mxu0 0.0
        %1743 = vmatpush.xpose.msra.mxu0 0.0
        %1744 = vmatpush.xpose.msra.mxu0 0.0
        %1745 = vmatpush.xpose.msra.mxu0 0.0
        %1746 = vmatpush.xpose.msra.mxu0 0.0
        %1747 = vmatpush.xpose.msra.mxu0 0.0
        %1748 = vmatpush.xpose.msra.mxu0 %v1731
        %1749 = vmatmul.f32.gmra.mxu0 %v1729
        %v1750 = vpop.f32.mrf.mxu0
        %v1751 = vadd.f32 0.0, %v1750
        %1752 = vdwg.mxu0
        %v1753 = vsel %vm1009, %v1751, -inf
        %1754 = vmax.xlane.f32.xlu0 %v1753
        %v1755 = vpop.xlane.xlu0 %1754
        %v1756 = vsub.f32 %v1751, %v1755
        %v1757 = vmul.f32 %v1756, 1.442695
        %v1758 = vpow.pop %v1757
        %v1759 = vsel %vm1009, %v1758, 0.0
        %1760 = vadd.xlane.f32.xlu0 %v1759
        %v1761 = vpop.xlane.xlu0 %1760
        %v1762 = vrcp.pop %v1761
        %v1763 = vmul.f32 %v1761, %v1762
        %v1764 = vsub.f32 1.0, %v1763
        %v1765 = vmul.f32 %v1762, %v1764
        %v1766 = vadd.f32 %v1762, %v1765
        %vm1767 = vweird.f32 %v1761
        %vm1768 = vweird.f32 %v1762
        %vm1769 = vmor %vm1767, %vm1768
        %v1770 = vsel %vm1769, %v1762, %v1766
        %v1771 = vand.u32 2147483647, %v1761
        %vm1772 = vcmp.eq.f32.partialorder %v1771, 8.507059e+37
        %v1773 = vand.u32 %v1761, 2147483648
        %v1774 = vor.u32 1.1754944e-38, %v1773
        %v1775 = vsel %vm1772, %v1774, %v1770
        %v1776 = vmul.f32 %v1758, %v1775
        %1777 = vrot.lane.b32.xlu0 %v1564, 48
        %v1778 = vpop.permute.xlu0 %1777
        %v1780 = vsel %vm1036, %v1776, 0
        %v1782 = vsel %vm1040, %v1778, 0
        %1784 = vmatpush.msra.mxu0 0.0
        %1785 = vmatpush.msra.mxu0 0.0
        %1786 = vmatpush.msra.mxu0 0.0
        %1787 = vmatpush.msra.mxu0 0.0
        %1788 = vmatpush.msra.mxu0 0.0
        %1789 = vmatpush.msra.mxu0 0.0
        %1790 = vmatpush.msra.mxu0 0.0
        %1791 = vmatpush.msra.mxu0 0.0
        %1792 = vmatpush.msra.mxu0 0.0
        %1793 = vmatpush.msra.mxu0 0.0
        %1794 = vmatpush.msra.mxu0 0.0
        %1795 = vmatpush.msra.mxu0 0.0
        %1796 = vmatpush.msra.mxu0 0.0
        %1797 = vmatpush.msra.mxu0 0.0
        %1798 = vmatpush.msra.mxu0 0.0
        %1799 = vmatpush.msra.mxu0 %v1782
        %1800 = vmatmul.f32.gmra.mxu0 %v1780
        %v1801 = vpop.f32.mrf.mxu0
        %v1802 = vadd.f32 0.0, %v1801
        %1803 = vdwg.mxu0
        %1804 = vrot.lane.b32.xlu0 %v1566, 104
        %v1805 = vpop.permute.xlu0 %1804
        %1806 = vrot.lane.b32.xlu0 %v1564, 72
        %v1807 = vpop.permute.xlu0 %1806
        %v1808 = vsel %vm983, %v1805, 0
        %v1810 = vsel %vm983, %v1807, 0
        %1812 = vmatpush.xpose.msra.mxu0 0.0
        %1813 = vmatpush.xpose.msra.mxu0 0.0
        %1814 = vmatpush.xpose.msra.mxu0 0.0
        %1815 = vmatpush.xpose.msra.mxu0 0.0
        %1816 = vmatpush.xpose.msra.mxu0 0.0
        %1817 = vmatpush.xpose.msra.mxu0 0.0
        %1818 = vmatpush.xpose.msra.mxu0 0.0
        %1819 = vmatpush.xpose.msra.mxu0 0.0
        %1820 = vmatpush.xpose.msra.mxu0 0.0
        %1821 = vmatpush.xpose.msra.mxu0 0.0
        %1822 = vmatpush.xpose.msra.mxu0 0.0
        %1823 = vmatpush.xpose.msra.mxu0 0.0
        %1824 = vmatpush.xpose.msra.mxu0 0.0
        %1825 = vmatpush.xpose.msra.mxu0 0.0
        %1826 = vmatpush.xpose.msra.mxu0 0.0
        %1827 = vmatpush.xpose.msra.mxu0 %v1810
        %1828 = vmatmul.f32.gmra.mxu0 %v1808
        %v1829 = vpop.f32.mrf.mxu0
        %v1830 = vadd.f32 0.0, %v1829
        %1831 = vdwg.mxu0
        %v1832 = vsel %vm1009, %v1830, -inf
        %1833 = vmax.xlane.f32.xlu0 %v1832
        %v1834 = vpop.xlane.xlu0 %1833
        %v1835 = vsub.f32 %v1830, %v1834
        %v1836 = vmul.f32 %v1835, 1.442695
        %v1837 = vpow.pop %v1836
        %v1838 = vsel %vm1009, %v1837, 0.0
        %1839 = vadd.xlane.f32.xlu0 %v1838
        %v1840 = vpop.xlane.xlu0 %1839
        %v1841 = vrcp.pop %v1840
        %v1842 = vmul.f32 %v1840, %v1841
        %v1843 = vsub.f32 1.0, %v1842
        %v1844 = vmul.f32 %v1841, %v1843
        %v1845 = vadd.f32 %v1841, %v1844
        %vm1846 = vweird.f32 %v1840
        %vm1847 = vweird.f32 %v1841
        %vm1848 = vmor %vm1846, %vm1847
        %v1849 = vsel %vm1848, %v1841, %v1845
        %v1850 = vand.u32 2147483647, %v1840
        %vm1851 = vcmp.eq.f32.partialorder %v1850, 8.507059e+37
        %v1852 = vand.u32 %v1840, 2147483648
        %v1853 = vor.u32 1.1754944e-38, %v1852
        %v1854 = vsel %vm1851, %v1853, %v1849
        %v1855 = vmul.f32 %v1837, %v1854
        %1856 = vrot.lane.b32.xlu0 %v1564, 40
        %v1857 = vpop.permute.xlu0 %1856
        %v1859 = vsel %vm1036, %v1855, 0
        %v1861 = vsel %vm1040, %v1857, 0
        %1863 = vmatpush.msra.mxu0 0.0
        %1864 = vmatpush.msra.mxu0 0.0
        %1865 = vmatpush.msra.mxu0 0.0
        %1866 = vmatpush.msra.mxu0 0.0
        %1867 = vmatpush.msra.mxu0 0.0
        %1868 = vmatpush.msra.mxu0 0.0
        %1869 = vmatpush.msra.mxu0 0.0
        %1870 = vmatpush.msra.mxu0 0.0
        %1871 = vmatpush.msra.mxu0 0.0
        %1872 = vmatpush.msra.mxu0 0.0
        %1873 = vmatpush.msra.mxu0 0.0
        %1874 = vmatpush.msra.mxu0 0.0
        %1875 = vmatpush.msra.mxu0 0.0
        %1876 = vmatpush.msra.mxu0 0.0
        %1877 = vmatpush.msra.mxu0 0.0
        %1878 = vmatpush.msra.mxu0 %v1861
        %1879 = vmatmul.f32.gmra.mxu0 %v1859
        %v1880 = vpop.f32.mrf.mxu0
        %v1881 = vadd.f32 0.0, %v1880
        %1882 = vdwg.mxu0
        %1884 = vrot.lane.b32.xlu0 %v1723, 8
        %v1885 = vpop.permute.xlu0 %1884
        %1888 = vrot.lane.b32.xlu0 %v1802, 16
        %v1889 = vpop.permute.xlu0 %1888
        %1892 = vrot.lane.b32.xlu0 %v1881, 24
        %v1893 = vpop.permute.xlu0 %1892
        %v1895 = vsel %vm983, %v1644, %v1885
        %v1896 = vsel %vm1313, %v1895, %v1889
        %v1897 = vsel %vm1315, %v1896, %v1893
        %s1898 = scalar_lea.vmem %s9, 32
        %v1899 = vld [vmem:[%s1898] sm:$0xff]
        %v1900 = vld [vmem:[%s1898 + $0x8] sm:$0xff]
        %v1901 = vld [vmem:[%s1898 + $0x10] sm:$0xff]
        %v1902 = vld [vmem:[%s1898 + $0x18] sm:$0xff]
        %v1904 = vsel %vm955, %v1897, 0
        %1906 = vmatpush.msra.mxu0 0.0
        %1907 = vmatpush.msra.mxu0 0.0
        %1908 = vmatpush.msra.mxu0 0.0
        %1909 = vmatpush.msra.mxu0 0.0
        %1910 = vmatpush.msra.mxu0 0.0
        %1911 = vmatpush.msra.mxu0 0.0
        %1912 = vmatpush.msra.mxu0 0.0
        %1913 = vmatpush.msra.mxu0 0.0
        %1914 = vmatpush.msra.mxu0 0.0
        %1915 = vmatpush.msra.mxu0 0.0
        %1916 = vmatpush.msra.mxu0 0.0
        %1917 = vmatpush.msra.mxu0 0.0
        %1918 = vmatpush.msra.mxu0 %v1902
        %1919 = vmatpush.msra.mxu0 %v1901
        %1920 = vmatpush.msra.mxu0 %v1900
        %1921 = vmatpush.msra.mxu0 %v1899
        %1922 = vmatmul.f32.gmra.mxu0 %v1904
        %v1923 = vpop.f32.mrf.mxu0
        %v1924 = vadd.f32 0.0, %v1923
        %1925 = vdwg.mxu0
        %v1926 = vadd.f32 %v1498, %v1924
        %s1927 = scalar_lea.vmem %s10, 1
        %v1928 = vld [vmem:[%s1927] sm:$0x1]
        %v1930 = vperm.slane %v1928, 0
        %v1932 = vadd.f32 %v1926, %v1930
        %s1933 = scalar_lea.vmem %s11, 1
        %v1934 = vld [vmem:[%s1933] sm:$0x1]
        %s1935 = scalar_lea.vmem %s12, 1
        %v1936 = vld [vmem:[%s1935] sm:$0x1]
        %v1937 = vsel %vm909, %v1932, 0.0
        %1938 = vadd.xlane.f32.xlu0 %v1937
        %v1939 = vpop.xlane.xlu0 %1938
        %v1940 = vmul.f32 %v1939, %v919
        %v1941 = vsub.f32 %v1932, %v1940
        %v1942 = vmul.f32 %v1941, %v1941
        %v1943 = vsel %vm909, %v1942, 0.0
        %1944 = vadd.xlane.f32.xlu0 %v1943
        %v1945 = vpop.xlane.xlu0 %1944
        %v1946 = vmul.f32 %v1945, %v919
        %v1947 = vadd.f32 %v1946, 1e-06
        %v1948 = vrsqrt.pop %v1947
        %v1949 = vmul.f32 %v1948, %v1947
        %v1950 = vmul.f32 %v1949, %v1948
        %v1951 = vmul.f32 0.5, %v1950
        %v1952 = vsub.f32 1.5, %v1951
        %v1953 = vmul.f32 %v1948, %v1952
        %vm1954 = vweird.f32 %v1947
        %vm1955 = vweird.f32 %v1948
        %vm1956 = vmor %vm1954, %vm1955
        %v1957 = vsel %vm1956, %v1948, %v1953
        %v1958 = vmul.f32 %v1941, %v1957
        %v1960 = vperm.slane %v1934, 0
        %v1962 = vmul.f32 %v1958, %v1960
        %v1964 = vperm.slane %v1936, 0
        %v1966 = vadd.f32 %v1962, %v1964
        %s1967 = scalar_lea.vmem %s13, 32
        %v1968 = vld [vmem:[%s1967] sm:$0xff]
        %v1969 = vld [vmem:[%s1967 + $0x8] sm:$0xff]
        %v1970 = vld [vmem:[%s1967 + $0x10] sm:$0xff]
        %v1971 = vld [vmem:[%s1967 + $0x18] sm:$0xff]
        %s1972 = scalar_lea.vmem %s14, 1
        %v1973 = vld [vmem:[%s1972] sm:$0x1]
        %v1975 = vperm.slane %v1973, 0
        %v1978 = vsel %vm955, %v1966, 0
        %1980 = vmatpush.msra.mxu0 0.0
        %1981 = vmatpush.msra.mxu0 0.0
        %1982 = vmatpush.msra.mxu0 0.0
        %1983 = vmatpush.msra.mxu0 0.0
        %1984 = vmatpush.msra.mxu0 0.0
        %1985 = vmatpush.msra.mxu0 0.0
        %1986 = vmatpush.msra.mxu0 0.0
        %1987 = vmatpush.msra.mxu0 0.0
        %1988 = vmatpush.msra.mxu0 0.0
        %1989 = vmatpush.msra.mxu0 0.0
        %1990 = vmatpush.msra.mxu0 0.0
        %1991 = vmatpush.msra.mxu0 0.0
        %1992 = vmatpush.msra.mxu0 %v1971
        %1993 = vmatpush.msra.mxu0 %v1970
        %1994 = vmatpush.msra.mxu0 %v1969
        %1995 = vmatpush.msra.mxu0 %v1968
        %1996 = vmatmul.f32.gmra.mxu0 %v1978
        %v1997 = vpop.f32.mrf.mxu0
        %v1998 = vadd.f32 %v1975, %v1997
        %1999 = vdwg.mxu0
        %v2000 = vmul.f32 %v1998, 0.5
        %v2001 = vmul.f32 %v1998, 0.70710677
        %v2002 = vmul.f32 %v2001, %v2001
        %v2003 = vmin.f32 16.0, %v2002
        %v2004 = vmul.f32 %v2003, 2.1237322e-06
        %v2005 = vadd.f32 %v2004, 0.00028619796
        %v2006 = vmul.f32 %v2003, %v2005
        %v2007 = vadd.f32 %v2006, 0.0036580483
        %v2008 = vmul.f32 %v2003, %v2007
        %v2009 = vadd.f32 %v2008, 0.05243302
        %v2010 = vmul.f32 %v2003, %v2009
        %v2011 = vadd.f32 %v2010, 0.18741608
        %v2012 = vmul.f32 %v2003, %v2011
        %v2013 = vadd.f32 %v2012, 1.1283791
        %v2014 = vmul.f32 %v2001, %v2013
        %v2015 = vmul.f32 %v2003, 3.8918573e-05
        %v2016 = vadd.f32 %v2015, 0.001143296
        %v2017 = vmul.f32 %v2003, %v2016
        %v2018 = vadd.f32 %v2017, 0.014752088
        %v2019 = vmul.f32 %v2003, %v2018
        %v2020 = vadd.f32 %v2019, 0.112945676
        %v2021 = vmul.f32 %v2003, %v2020
        %v2022 = vadd.f32 %v2021, 0.4994258
        %v2023 = vmul.f32 %v2003, %v2022
        %v2024 = vadd.f32 %v2023, 1.0
        %v2025 = vrcp.pop %v2024
        %v2026 = vmul.f32 %v2024, %v2025
        %v2027 = vsub.f32 1.0, %v2026
        %v2028 = vmul.f32 %v2025, %v2027
        %v2029 = vadd.f32 %v2025, %v2028
        %vm2030 = vweird.f32 %v2024
        %vm2031 = vweird.f32 %v2025
        %vm2032 = vmor %vm2030, %vm2031
        %v2033 = vsel %vm2032, %v2025, %v2029
        %v2034 = vand.u32 2147483647, %v2024
        %vm2035 = vcmp.eq.f32.partialorder %v2034, 8.507059e+37
        %v2036 = vand.u32 %v2024, 2147483648
        %v2037 = vor.u32 1.1754944e-38, %v2036
        %v2038 = vsel %vm2035, %v2037, %v2033
        %v2039 = vmul.f32 %v2014, %v2038
        %v2040 = vmin.f32 %v2039, 1.0
        %v2041 = vmax.f32 %v2040, -1.0
        %v2042 = vadd.f32 %v2041, 1.0
        %v2043 = vmul.f32 %v2000, %v2042
        %s2044 = scalar_lea.vmem %s15, 128
        %v2045 = vld [vmem:[%s2044] sm:$0xff]
        %v2046 = vld [vmem:[%s2044 + $0x8] sm:$0xff]
        %v2047 = vld [vmem:[%s2044 + $0x10] sm:$0xff]
        %v2048 = vld [vmem:[%s2044 + $0x18] sm:$0xff]
        %v2049 = vld [vmem:[%s2044 + $0x20] sm:$0xff]
        %v2050 = vld [vmem:[%s2044 + $0x28] sm:$0xff]
        %v2051 = vld [vmem:[%s2044 + $0x30] sm:$0xff]
        %v2052 = vld [vmem:[%s2044 + $0x38] sm:$0xff]
        %v2053 = vld [vmem:[%s2044 + $0x40] sm:$0xff]
        %v2054 = vld [vmem:[%s2044 + $0x48] sm:$0xff]
        %v2055 = vld [vmem:[%s2044 + $0x50] sm:$0xff]
        %v2056 = vld [vmem:[%s2044 + $0x58] sm:$0xff]
        %v2057 = vld [vmem:[%s2044 + $0x60] sm:$0xff]
        %v2058 = vld [vmem:[%s2044 + $0x68] sm:$0xff]
        %v2059 = vld [vmem:[%s2044 + $0x70] sm:$0xff]
        %v2060 = vld [vmem:[%s2044 + $0x78] sm:$0xff]
        %2061 = vmatpush.msra.mxu0 %v2060
        %2062 = vmatpush.msra.mxu0 %v2059
        %2063 = vmatpush.msra.mxu0 %v2058
        %2064 = vmatpush.msra.mxu0 %v2057
        %2065 = vmatpush.msra.mxu0 %v2056
        %2066 = vmatpush.msra.mxu0 %v2055
        %2067 = vmatpush.msra.mxu0 %v2054
        %2068 = vmatpush.msra.mxu0 %v2053
        %2069 = vmatpush.msra.mxu0 %v2052
        %2070 = vmatpush.msra.mxu0 %v2051
        %2071 = vmatpush.msra.mxu0 %v2050
        %2072 = vmatpush.msra.mxu0 %v2049
        %2073 = vmatpush.msra.mxu0 %v2048
        %2074 = vmatpush.msra.mxu0 %v2047
        %2075 = vmatpush.msra.mxu0 %v2046
        %2076 = vmatpush.msra.mxu0 %v2045
        %2077 = vmatmul.f32.gmra.mxu0 %v2043
        %v2078 = vpop.f32.mrf.mxu0
        %v2079 = vadd.f32 0.0, %v2078
        %2080 = vdwg.mxu0
        %v2081 = vadd.f32 %v1932, %v2079
        %s2082 = scalar_lea.vmem %s16, 1
        %v2083 = vld [vmem:[%s2082] sm:$0x1]
        %v2085 = vperm.slane %v2083, 0
        %v2087 = vadd.f32 %v2081, %v2085
        %v2088 = vld [vmem:[%s17] sm:$0x1]
        %v2089 = vld [vmem:[%s18] sm:$0x1]
        %vm2090 = vcmask 253952
        %v2091 = vsel %vm2090, %v2087, 0.0
        %2092 = vadd.xlane.f32.xlu0 %v2091
        %v2093 = vpop.xlane.xlu0 %2092
        %v2094 = vmul.f32 %v2093, %v919
        %v2095 = vsub.f32 %v2087, %v2094
        %v2096 = vmul.f32 %v2095, %v2095
        %v2097 = vsel %vm2090, %v2096, 0.0
        %2098 = vadd.xlane.f32.xlu0 %v2097
        %v2099 = vpop.xlane.xlu0 %2098
        %v2100 = vmul.f32 %v2099, %v919
        %v2101 = vadd.f32 %v2100, 1e-06
        %v2102 = vrsqrt.pop %v2101
        %v2103 = vmul.f32 %v2102, %v2101
        %v2104 = vmul.f32 %v2103, %v2102
        %v2105 = vmul.f32 0.5, %v2104
        %v2106 = vsub.f32 1.5, %v2105
        %v2107 = vmul.f32 %v2102, %v2106
        %vm2108 = vweird.f32 %v2101
        %vm2109 = vweird.f32 %v2102
        %vm2110 = vmor %vm2108, %vm2109
        %v2111 = vsel %vm2110, %v2102, %v2107
        %v2112 = vmul.f32 %v2095, %v2111
        %v2113 = vmul.f32 %v2112, %v2088
        %v2114 = vadd.f32 %v2113, %v2089
        %v2115 = vld [vmem:[%s19] sm:$0xff]
        %v2116 = vld [vmem:[%s19 + $0x8] sm:$0xff]
        %v2117 = vld [vmem:[%s19 + $0x10] sm:$0xff]
        %v2118 = vld [vmem:[%s19 + $0x18] sm:$0xff]
        %v2119 = vld [vmem:[%s20] sm:$0x1]
        %v2121 = vsel %vm955, %v2114, 0
        %2123 = vmatpush.msra.mxu0 0.0
        %2124 = vmatpush.msra.mxu0 0.0
        %2125 = vmatpush.msra.mxu0 0.0
        %2126 = vmatpush.msra.mxu0 0.0
        %2127 = vmatpush.msra.mxu0 0.0
        %2128 = vmatpush.msra.mxu0 0.0
        %2129 = vmatpush.msra.mxu0 0.0
        %2130 = vmatpush.msra.mxu0 0.0
        %2131 = vmatpush.msra.mxu0 0.0
        %2132 = vmatpush.msra.mxu0 0.0
        %2133 = vmatpush.msra.mxu0 0.0
        %2134 = vmatpush.msra.mxu0 0.0
        %2135 = vmatpush.msra.mxu0 %v2118
        %2136 = vmatpush.msra.mxu0 %v2117
        %2137 = vmatpush.msra.mxu0 %v2116
        %2138 = vmatpush.msra.mxu0 %v2115
        %2139 = vmatmul.f32.gmra.mxu0 %v2121
        %v2140 = vpop.f32.mrf.mxu0
        %v2141 = vadd.f32 %v2119, %v2140
        %2142 = vdwg.mxu0
        %vm2143 = vcmask 122880
        %2144 = vst.msk [vmem:[%s648] sm:$0x1] %vm2143, %v2141
        %s2145 = sand.u32 %s489, 1
        %s2146 = scalar_lea.sflag [#allocation3], %s2145
        %s2147 = sand.u32 %s489, 1
        %s2148 = scalar_lea.vmem [#allocation2], %s2147
        // Predicated region
        $region105: #{vit_forward.1} parent=103 // pred_check
          %p2149 = pneg %p499
        $region106: #{vit_forward.1} parent=103 // pred_check_branch
          %2151 = sbr.rel (%p2149) target = $region108
        $region107: #{vit_forward.1} parent=103 // pred_region
          %2153 = vsyncadd %s2146, 0
          %s2154 = scalar_lea.hbm %s21, %s35
          %s2156 = sshll.u32 %s2148, 4
          %s2157 = int_to_ptr.vmem [resolvable:$true] %s2156
          %s2158 = sshll.u32 %s2154, 4
          %s2159 = int_to_ptr.hbm [resolvable:$true] %s2158
          %2161 = dma.vmem_to_hbm [thread:$0]  %s2157, 16, %s2159, %s2146
        $region108: #{vit_forward.1} parent=103 // pred_fallthru
          _
      $region104: #{vit_forward.1} parent=5 // pred_fallthru
        _
      %p2162 = scmp.le.s32.totalorder 2, %s30
      // Predicated region
      $region109: #{vit_forward.1} parent=5 // pred_check
        %p2163 = pneg %p2162
      $region110: #{vit_forward.1} parent=5 // pred_check_branch
        %2165 = sbr.rel (%p2163) target = $region112
      $region111: #{vit_forward.1} parent=5 // pred_region
        %s2166 = ssub.s32 %s30, 2
        // Predicated region
        $region113: #{vit_forward.1} parent=111 // pred_check
          %p2167 = pneg %p505
        $region114: #{vit_forward.1} parent=111 // pred_check_branch
          %2169 = sbr.rel (%p2167) target = $region116
        $region115: #{vit_forward.1} parent=111 // pred_region
          %s2170 = sand.u32 %s490, 1
          %s2171 = scalar_lea.sflag [#allocation3], %s2170
          %s2172 = sand.u32 %s490, 1
          %s2173 = scalar_lea.vmem [#allocation2], %s2172
          %2175 = dma.done %s2171, 16
        $region116: #{vit_forward.1} parent=111 // pred_fallthru
          _
      $region112: #{vit_forward.1} parent=5 // pred_fallthru
        _
    $region6: #{vit_forward.1} parent=1 // loop_footer
      %s34 = sadd.s32 1, %s30
    $region7: #{vit_forward.1} parent=1 // loop_footer_branch
      %29 = sbr.rel target = $region3
    $region8: #{vit_forward.1} parent=1 // loop_exit
      _
    %2176 = vsyncpa [#allocation3], 1
    %s2177 = scalar_lea.sflag [#allocation3], 1
    %2178 = vsyncpa %s2177, 1

</llo_original>
